<compile_context>
chip_gen: v6e
topology: v6e:2x2x1
jax: 0.10.0
libtpu: 0.0.40
codegen_flags: <defaults>
</compile_context>

<pallas_src>
import numpy as np

import jax
import jax.numpy as jnp
from jax.experimental import pallas as pl
from jax.experimental.pallas import tpu as pltpu


# ----------------------------------------------------------------------------
# Fully fused encoder kernel
# ----------------------------------------------------------------------------
def _build_encoder_kernel(*, N, ds, ohf, latent, eps):
    """stem -> ds x (3x3/s2 conv -> BN -> ReLU) -> flatten -> fc1 -> fc2 -> z."""

    def mmw(a, b):
        # weight-carrying matmul: bf16 MXU operands, f32 accumulation
        return jnp.dot(a.astype(jnp.bfloat16), b.astype(jnp.bfloat16),
                       preferred_element_type=jnp.float32)

    def mms(a, b):
        # 0/1 selection / statistics matmul kept in f32 (exact row moves)
        return jnp.dot(a, b, preferred_element_type=jnp.float32)

    def kernel(*refs):
        it = iter(refs)
        x_ref = next(it)                       # (N*H, W*3)   input pixels
        w0_ref, b0_ref = next(it), next(it)    # 1x1 conv stem (block-diag form)
        stages = []
        for _ in range(ds):
            stages.append((
                [next(it) for _ in range(3)],  # R_kh  (N*oh, N*ih)        f32
                [next(it) for _ in range(3)],  # E_kh  (iw*cin, ow*cout)   bf16
                next(it),                      # A     (ow*cout, ow*cout)  f32
                next(it), next(it), next(it))) # bias / gamma / beta (1, ow*cout)
        sflat_ref = next(it)                   # (ohf*N, N*ohf)  flatten select
        w1_ref, b1_ref = next(it), next(it)    # fc1
        w2_ref, b2_ref = next(it), next(it)    # fc2
        r_ref = next(it)                       # (1, latent) shared noise
        out_ref = next(it)                     # (N, 4*latent) packed head

        # ---- stem: 1x1 conv as a single lane-dense matmul (I_W (x) w0 folded
        #      into the weight); activation layout is (N*h, w*c) throughout.
        act = mmw(x_ref[...], w0_ref[...]) + b0_ref[...]        # (N*H, W*c0)

        # ---- downsample stages: 3x3/s2 conv ==  sum_kh  R_kh @ (act @ E_kh).
        #      E_kh folds the stride-2 column selection, the zero padding and
        #      the conv weights, so the (kw, cin) contraction runs on the MXU.
        for (R, E, a_ref, bias_ref, gamma_ref, beta_ref) in stages:
            raw = mms(R[0][...], mmw(act, E[0][...]))
            raw = raw + mms(R[1][...], mmw(act, E[1][...]))
            raw = raw + mms(R[2][...], mmw(act, E[2][...]))
            xr = raw + bias_ref[...]                            # (N*oh, ow*cout)

            # BatchNorm (training batch statistics) per output channel:
            # row-reduce to per-(j, c) stats, then average over j with a tiny
            # constant matmul (keeps everything reshape-free and f32).
            m1 = jnp.mean(xr, axis=0, keepdims=True)
            m2 = jnp.mean(xr * xr, axis=0, keepdims=True)
            mean = mms(m1, a_ref[...])
            var = mms(m2, a_ref[...]) - mean * mean
            act = (xr - mean) * jax.lax.rsqrt(var + eps) * gamma_ref[...] \
                  + beta_ref[...]
            act = jnp.maximum(act, 0.0)

        # ---- flatten: rows (n, i) -> row n with lane blocks ordered (i, j, c).
        #      torch's NCHW flatten order is already folded into the fc1 rows.
        stacked = mms(sflat_ref[...], act)                      # (ohf*N, owf*c)
        flat = jnp.concatenate(
            [stacked[i * N:(i + 1) * N, :] for i in range(ohf)], axis=1)

        # ---- fc1 + ReLU, fc2, reparameterization; single full-width store.
        h1 = jnp.maximum(mmw(flat, w1_ref[...]) + b1_ref[...], 0.0)
        res = mmw(h1, w2_ref[...]) + b2_ref[...]                # (N, 2*latent)

        L = latent
        mu = res[:, :L]
        log_sigma = res[:, L:]
        sigma = jnp.exp(log_sigma)
        z = mu + sigma * r_ref[...]
        # packed lane-dense output: [ z | mu | log_sigma | sigma ]  (N, 4L)
        out_ref[...] = jnp.concatenate([z, mu, log_sigma, sigma], axis=1)

    return kernel


# ----------------------------------------------------------------------------
# Encoder module (deterministic synthetic parameters, torch-compatible layout)
# ----------------------------------------------------------------------------
class VAEEncoderPallas:
    def __init__(self, img_size=16, latent_size=32, start_channels=4,
                 downsamplings=2, key=None):
        if key is None:
            key = jax.random.PRNGKey(0)
        assert downsamplings >= 1 and img_size % (2 ** downsamplings) == 0
        self.img_size = img_size
        self.latent_size = latent_size
        self.start_channels = start_channels
        self.downsamplings = downsamplings
        self.eps = 1e-5

        keys = jax.random.split(key, downsamplings + 3)
        ki = iter(keys)

        def conv_init(k, cout, cin, kh, kw):
            fan_in = cin * kh * kw
            return (jax.random.normal(k, (cout, cin, kh, kw), jnp.float32)
                    / jnp.sqrt(float(fan_in)))

        # --- torch-layout parameters (kept for the pure-JAX reference check)
        self.w0_t = conv_init(next(ki), start_channels, 3, 1, 1)
        self.b0_t = jnp.zeros((start_channels,), jnp.float32)

        self.down_t = []
        cin = start_channels
        for _ in range(downsamplings):
            cout = 2 * cin
            w = conv_init(next(ki), cout, cin, 3, 3)
            self.down_t.append((w,
                                jnp.zeros((cout,), jnp.float32),   # conv bias
                                jnp.ones((cout,), jnp.float32),    # BN gamma
                                jnp.zeros((cout,), jnp.float32)))  # BN beta
            cin = cout
        c_last = cin
        ohf = img_size // (2 ** downsamplings)
        feat = c_last * ohf * ohf

        self.w_fc1_t = (jax.random.normal(next(ki), (128, feat), jnp.float32)
                        / jnp.sqrt(float(feat)))
        self.b_fc1_t = jnp.zeros((128,), jnp.float32)
        self.w_fc2_t = (jax.random.normal(next(ki), (2 * latent_size, 128),
                                          jnp.float32) / jnp.sqrt(128.0))
        self.b_fc2_t = jnp.zeros((2 * latent_size,), jnp.float32)

        # --- kernel-layout constants (batch independent) -----------------
        W = img_size
        w0m = np.asarray(self.w0_t).reshape(start_channels, 3).T     # (3, c0)
        self.w0_blk = jnp.asarray(
            np.kron(np.eye(W, dtype=np.float32), w0m), jnp.bfloat16)  # (W*3, W*c0)
        self.b0_bc = jnp.asarray(
            np.tile(np.asarray(self.b0_t), W)[None, :], jnp.float32)  # (1, W*c0)

        # per stage: E_kh (column-selection x weights), A (channel averaging),
        # and per-(j, c) broadcasts of conv bias / BN gamma / BN beta.
        self.stage_consts = []
        iw = img_size
        for (w, b, g, be) in self.down_t:
            cout_i, cin_i = int(w.shape[0]), int(w.shape[1])
            ow = iw // 2
            wn = np.asarray(w)
            Es = []
            for kh in range(3):
                E = np.zeros((iw * cin_i, ow * cout_i), np.float32)
                for j in range(ow):
                    for kw in range(3):
                        wc = 2 * j + kw - 1            # padded col -> real col
                        if 0 <= wc < iw:
                            E[wc * cin_i:(wc + 1) * cin_i,
                              j * cout_i:(j + 1) * cout_i] += wn[:, :, kh, kw].T
                Es.append(jnp.asarray(E, jnp.bfloat16))
            A = jnp.asarray(
                np.kron(np.full((ow, ow), 1.0 / ow, np.float32),
                        np.eye(cout_i, dtype=np.float32)), jnp.float32)
            bias_bc = jnp.asarray(np.tile(np.asarray(b), ow)[None, :], jnp.float32)
            gamma_bc = jnp.asarray(np.tile(np.asarray(g), ow)[None, :], jnp.float32)
            beta_bc = jnp.asarray(np.tile(np.asarray(be), ow)[None, :], jnp.float32)
            self.stage_consts.append((Es, A, bias_bc, gamma_bc, beta_bc))
            iw = ow

        # fold torch's NCHW flatten into the fc1 weight rows -> (i, j, c) order
        w1 = np.asarray(self.w_fc1_t).T.reshape(c_last, ohf, ohf, 128)
        w1 = w1.transpose(1, 2, 0, 3).reshape(feat, 128)
        self.w_fc1_k = jnp.asarray(w1, jnp.bfloat16)
        self.b_fc1_k = jnp.asarray(np.asarray(self.b_fc1_t)[None, :], jnp.float32)
        self.w_fc2_k = jnp.asarray(np.asarray(self.w_fc2_t).T, jnp.bfloat16)
        self.b_fc2_k = jnp.asarray(np.asarray(self.b_fc2_t)[None, :], jnp.float32)

        self._c_last = c_last
        self._ohf = ohf
        self._fwd_cache = {}

    def _build_forward(self, N):
        H = W = self.img_size
        ds = self.downsamplings
        L = self.latent_size
        ohf = self._ohf

        # batch-dependent 0/1 row-selection constants (stride-2 rows + top pad)
        stage_R = []
        ih = H
        for _ in range(ds):
            oh = ih // 2
            Rs = []
            for kh in range(3):
                R = np.zeros((N * oh, N * ih), np.float32)
                for n in range(N):
                    for i in range(oh):
                        h = 2 * i + kh - 1
                        if 0 <= h < ih:
                            R[n * oh + i, n * ih + h] = 1.0
                Rs.append(jnp.asarray(R, jnp.float32))
            stage_R.append(Rs)
            ih = oh

        Sflat = np.zeros((ohf * N, N * ohf), np.float32)
        for i in range(ohf):
            for n in range(N):
                Sflat[i * N + n, n * ohf + i] = 1.0
        Sflat = jnp.asarray(Sflat, jnp.float32)

        kernel = _build_encoder_kernel(N=N, ds=ds, ohf=ohf, latent=L,
                                       eps=self.eps)

        consts = [self.w0_blk, self.b0_bc]
        for s in range(ds):
            Es, A, bias_bc, gamma_bc, beta_bc = self.stage_consts[s]
            consts.extend(stage_R[s])
            consts.extend(Es)
            consts.extend([A, bias_bc, gamma_bc, beta_bc])
        consts.extend([Sflat, self.w_fc1_k, self.b_fc1_k,
                       self.w_fc2_k, self.b_fc2_k])

        def forward(x_nchw, r):
            # NCHW -> NHWC -> (N*H, W*3): lane-dense, small input DMA.
            x2d = jnp.transpose(x_nchw, (0, 2, 3, 1)).reshape(N * H, W * 3)
            x2d = x2d.astype(jnp.float32)
            inputs = [x2d] + consts + [r.reshape(1, L).astype(jnp.float32)]
            out = pl.pallas_call(
                kernel,
                out_shape=jax.ShapeDtypeStruct((N, 4 * L), jnp.float32),
                grid=(1,),
                in_specs=[pl.BlockSpec(a.shape, lambda i: (0, 0))
                          for a in inputs],
                out_specs=pl.BlockSpec((N, 4 * L), lambda i: (0, 0)),
                compiler_params=pltpu.CompilerParams(
                    dimension_semantics=("arbitrary",),
                    # actual post-(8,128)-tiling footprint is ~2 MiB; leave
                    # headroom but stay far below v7x's 64 MiB physical VMEM.
                    vmem_limit_bytes=16 * 1024 * 1024),
            )(*inputs)
            z = out[:, 0:L]
            mu = out[:, L:2 * L]
            sigma = out[:, 3 * L:4 * L]
            return z, (mu, sigma)

        return jax.jit(forward)

    def __call__(self, x_nchw, noise_key):
        N = int(x_nchw.shape[0])
        if N not in self._fwd_cache:
            self._fwd_cache[N] = self._build_forward(N)
        # torch.randn(latent_size): one standard-normal vector shared across the
        # batch (RNG bitstream differs from CUDA; semantics match).
        r = jax.random.normal(noise_key, (self.latent_size,), jnp.float32)
        return self._fwd_cache[N](x_nchw, r)


# ----------------------------------------------------------------------------
# Pure-JAX/XLA reference (torch-layout weights) for a numerical sanity check
# ----------------------------------------------------------------------------
def _reference_encoder(enc, x_nchw, r):
    dn = ("NCHW", "OIHW", "NCHW")
    y = jax.lax.conv_general_dilated(x_nchw.astype(jnp.float32), enc.w0_t,
                                     window_strides=(1, 1), padding="VALID",
                                     dimension_numbers=dn)
    y = y + enc.b0_t[None, :, None, None]
    for (w, b, g, be) in enc.down_t:
        y = jax.lax.conv_general_dilated(y, w, window_strides=(2, 2),
                                         padding=((1, 1), (1, 1)),
                                         dimension_numbers=dn)
        y = y + b[None, :, None, None]
        mean = jnp.mean(y, axis=(0, 2, 3), keepdims=True)
        var = jnp.mean(jnp.square(y - mean), axis=(0, 2, 3), keepdims=True)
        y = (y - mean) * jax.lax.rsqrt(var + enc.eps) * g[None, :, None, None] \
            + be[None, :, None, None]
        y = jnp.maximum(y, 0.0)
    flat = y.reshape(y.shape[0], -1)
    h = jnp.maximum(flat @ enc.w_fc1_t.T + enc.b_fc1_t, 0.0)
    res = h @ enc.w_fc2_t.T + enc.b_fc2_t
    L = enc.latent_size
    mu, right = res[:, :L], res[:, L:]
    sigma = jnp.exp(right)
    z = mu + sigma * r[None, :]
    return z, mu, sigma


if __name__ == "__main__":
    key = jax.random.PRNGKey(0)
    pkey, xkey, nkey = jax.random.split(key, 3)

    enc = VAEEncoderPallas(img_size=16, latent_size=32, start_channels=4,
                           downsamplings=2, key=pkey)
    x = jax.random.normal(xkey, (2, 3, 16, 16), jnp.float32)

    z, (mu, sigma) = enc(x, nkey)
    jax.block_until_ready((z, mu, sigma))

    assert z.shape == (2, 32)
    assert mu.shape == (2, 32)
    assert sigma.shape == (2, 32)
    assert bool(jnp.all(sigma > 0.0))

    # Numerical sanity check vs. the XLA reference (tolerance covers bf16 MXU).
    r = jax.random.normal(nkey, (enc.latent_size,), jnp.float32)
    z_ref, mu_ref, sigma_ref = _reference_encoder(enc, x, r)

    def _close(a, b, tol=5e-2):
        return float(jnp.max(jnp.abs(a - b))) <= tol * (1.0 + float(jnp.max(jnp.abs(b))))

    assert _close(mu, mu_ref), "mu mismatch vs reference"
    assert _close(sigma, sigma_ref), "sigma mismatch vs reference"
    assert _close(z, z_ref), "z mismatch vs reference"

    print("KERNEL_OK")
</pallas_src>

<mosaic_0001>
module attributes {stable_mosaic.version = 11 : i64} {
  func.func @kernel(%arg0: i32, %arg1: memref<32x48xf32, #tpu.memory_space<vmem>>, %arg2: memref<48x64xbf16, #tpu.memory_space<vmem>>, %arg3: memref<1x64xf32, #tpu.memory_space<vmem>>, %arg4: memref<16x32xf32, #tpu.memory_space<vmem>>, %arg5: memref<16x32xf32, #tpu.memory_space<vmem>>, %arg6: memref<16x32xf32, #tpu.memory_space<vmem>>, %arg7: memref<64x64xbf16, #tpu.memory_space<vmem>>, %arg8: memref<64x64xbf16, #tpu.memory_space<vmem>>, %arg9: memref<64x64xbf16, #tpu.memory_space<vmem>>, %arg10: memref<64x64xf32, #tpu.memory_space<vmem>>, %arg11: memref<1x64xf32, #tpu.memory_space<vmem>>, %arg12: memref<1x64xf32, #tpu.memory_space<vmem>>, %arg13: memref<1x64xf32, #tpu.memory_space<vmem>>, %arg14: memref<8x16xf32, #tpu.memory_space<vmem>>, %arg15: memref<8x16xf32, #tpu.memory_space<vmem>>, %arg16: memref<8x16xf32, #tpu.memory_space<vmem>>, %arg17: memref<64x64xbf16, #tpu.memory_space<vmem>>, %arg18: memref<64x64xbf16, #tpu.memory_space<vmem>>, %arg19: memref<64x64xbf16, #tpu.memory_space<vmem>>, %arg20: memref<64x64xf32, #tpu.memory_space<vmem>>, %arg21: memref<1x64xf32, #tpu.memory_space<vmem>>, %arg22: memref<1x64xf32, #tpu.memory_space<vmem>>, %arg23: memref<1x64xf32, #tpu.memory_space<vmem>>, %arg24: memref<8x8xf32, #tpu.memory_space<vmem>>, %arg25: memref<256x128xbf16, #tpu.memory_space<vmem>>, %arg26: memref<1x128xf32, #tpu.memory_space<vmem>>, %arg27: memref<128x64xbf16, #tpu.memory_space<vmem>>, %arg28: memref<1x64xf32, #tpu.memory_space<vmem>>, %arg29: memref<1x32xf32, #tpu.memory_space<vmem>>, %arg30: memref<2x128xf32, #tpu.memory_space<vmem>>) attributes {dimension_semantics = [#tpu.dimension_semantics<arbitrary>], iteration_bounds = array<i64: 1>, scalar_prefetch = 0 : i64, scratch_operands = 0 : i64, tpu.core_type = #tpu.core_type<tc>, window_params = [{pipeline_mode = #tpu.pipeline_mode<synchronous>, transform_indices = @transform_0, window_bounds = array<i64: 32, 48>}, {pipeline_mode = #tpu.pipeline_mode<synchronous>, transform_indices = @transform_1, window_bounds = array<i64: 48, 64>}, {pipeline_mode = #tpu.pipeline_mode<synchronous>, transform_indices = @transform_2, window_bounds = array<i64: 1, 64>}, {pipeline_mode = #tpu.pipeline_mode<synchronous>, transform_indices = @transform_3, window_bounds = array<i64: 16, 32>}, {pipeline_mode = #tpu.pipeline_mode<synchronous>, transform_indices = @transform_4, window_bounds = array<i64: 16, 32>}, {pipeline_mode = #tpu.pipeline_mode<synchronous>, transform_indices = @transform_5, window_bounds = array<i64: 16, 32>}, {pipeline_mode = #tpu.pipeline_mode<synchronous>, transform_indices = @transform_6, window_bounds = array<i64: 64, 64>}, {pipeline_mode = #tpu.pipeline_mode<synchronous>, transform_indices = @transform_7, window_bounds = array<i64: 64, 64>}, {pipeline_mode = #tpu.pipeline_mode<synchronous>, transform_indices = @transform_8, window_bounds = array<i64: 64, 64>}, {pipeline_mode = #tpu.pipeline_mode<synchronous>, transform_indices = @transform_9, window_bounds = array<i64: 64, 64>}, {pipeline_mode = #tpu.pipeline_mode<synchronous>, transform_indices = @transform_10, window_bounds = array<i64: 1, 64>}, {pipeline_mode = #tpu.pipeline_mode<synchronous>, transform_indices = @transform_11, window_bounds = array<i64: 1, 64>}, {pipeline_mode = #tpu.pipeline_mode<synchronous>, transform_indices = @transform_12, window_bounds = array<i64: 1, 64>}, {pipeline_mode = #tpu.pipeline_mode<synchronous>, transform_indices = @transform_13, window_bounds = array<i64: 8, 16>}, {pipeline_mode = #tpu.pipeline_mode<synchronous>, transform_indices = @transform_14, window_bounds = array<i64: 8, 16>}, {pipeline_mode = #tpu.pipeline_mode<synchronous>, transform_indices = @transform_15, window_bounds = array<i64: 8, 16>}, {pipeline_mode = #tpu.pipeline_mode<synchronous>, transform_indices = @transform_16, window_bounds = array<i64: 64, 64>}, {pipeline_mode = #tpu.pipeline_mode<synchronous>, transform_indices = @transform_17, window_bounds = array<i64: 64, 64>}, {pipeline_mode = #tpu.pipeline_mode<synchronous>, transform_indices = @transform_18, window_bounds = array<i64: 64, 64>}, {pipeline_mode = #tpu.pipeline_mode<synchronous>, transform_indices = @transform_19, window_bounds = array<i64: 64, 64>}, {pipeline_mode = #tpu.pipeline_mode<synchronous>, transform_indices = @transform_20, window_bounds = array<i64: 1, 64>}, {pipeline_mode = #tpu.pipeline_mode<synchronous>, transform_indices = @transform_21, window_bounds = array<i64: 1, 64>}, {pipeline_mode = #tpu.pipeline_mode<synchronous>, transform_indices = @transform_22, window_bounds = array<i64: 1, 64>}, {pipeline_mode = #tpu.pipeline_mode<synchronous>, transform_indices = @transform_23, window_bounds = array<i64: 8, 8>}, {pipeline_mode = #tpu.pipeline_mode<synchronous>, transform_indices = @transform_24, window_bounds = array<i64: 256, 128>}, {pipeline_mode = #tpu.pipeline_mode<synchronous>, transform_indices = @transform_25, window_bounds = array<i64: 1, 128>}, {pipeline_mode = #tpu.pipeline_mode<synchronous>, transform_indices = @transform_26, window_bounds = array<i64: 128, 64>}, {pipeline_mode = #tpu.pipeline_mode<synchronous>, transform_indices = @transform_27, window_bounds = array<i64: 1, 64>}, {pipeline_mode = #tpu.pipeline_mode<synchronous>, transform_indices = @transform_28, window_bounds = array<i64: 1, 32>}, {pipeline_mode = #tpu.pipeline_mode<synchronous>, transform_indices = @transform_29, window_bounds = array<i64: 2, 128>}]} {
    %c0 = arith.constant 0 : index
    %c0_0 = arith.constant 0 : index
    %0 = vector.load %arg1[%c0, %c0_0] : memref<32x48xf32, #tpu.memory_space<vmem>>, vector<32x48xf32>
    %c0_1 = arith.constant 0 : index
    %c0_2 = arith.constant 0 : index
    %1 = vector.load %arg2[%c0_1, %c0_2] : memref<48x64xbf16, #tpu.memory_space<vmem>>, vector<48x64xbf16>
    %2 = arith.truncf %0 : vector<32x48xf32> to vector<32x48xbf16>
    %cst = arith.constant dense<0.000000e+00> : vector<32x64xf32>
    %3 = tpu.matmul %2, %1, %cst {dimension_numbers = #tpu.dot_dimension_numbers<[1], [0], [0], [1], [0, 0, 1, 1], [], []>} : vector<32x48xbf16>, vector<48x64xbf16>, vector<32x64xf32> -> vector<32x64xf32>
    %c0_3 = arith.constant 0 : index
    %c0_4 = arith.constant 0 : index
    %4 = vector.load %arg3[%c0_3, %c0_4] : memref<1x64xf32, #tpu.memory_space<vmem>>, vector<1x64xf32>
    %5 = vector.broadcast %4 : vector<1x64xf32> to vector<32x64xf32>
    %6 = arith.addf %3, %5 : vector<32x64xf32>
    %c0_5 = arith.constant 0 : index
    %c0_6 = arith.constant 0 : index
    %7 = vector.load %arg4[%c0_5, %c0_6] : memref<16x32xf32, #tpu.memory_space<vmem>>, vector<16x32xf32>
    %c0_7 = arith.constant 0 : index
    %c0_8 = arith.constant 0 : index
    %8 = vector.load %arg7[%c0_7, %c0_8] : memref<64x64xbf16, #tpu.memory_space<vmem>>, vector<64x64xbf16>
    %9 = arith.truncf %6 : vector<32x64xf32> to vector<32x64xbf16>
    %cst_9 = arith.constant dense<0.000000e+00> : vector<32x64xf32>
    %10 = tpu.matmul %9, %8, %cst_9 {dimension_numbers = #tpu.dot_dimension_numbers<[1], [0], [0], [1], [0, 0, 1, 1], [], []>} : vector<32x64xbf16>, vector<64x64xbf16>, vector<32x64xf32> -> vector<32x64xf32>
    %cst_10 = arith.constant dense<0.000000e+00> : vector<16x64xf32>
    %11 = tpu.matmul %7, %10, %cst_10 {dimension_numbers = #tpu.dot_dimension_numbers<[1], [0], [0], [1], [0, 0, 1, 1], [], []>} : vector<16x32xf32>, vector<32x64xf32>, vector<16x64xf32> -> vector<16x64xf32>
    %c0_11 = arith.constant 0 : index
    %c0_12 = arith.constant 0 : index
    %12 = vector.load %arg5[%c0_11, %c0_12] : memref<16x32xf32, #tpu.memory_space<vmem>>, vector<16x32xf32>
    %c0_13 = arith.constant 0 : index
    %c0_14 = arith.constant 0 : index
    %13 = vector.load %arg8[%c0_13, %c0_14] : memref<64x64xbf16, #tpu.memory_space<vmem>>, vector<64x64xbf16>
    %14 = arith.truncf %6 : vector<32x64xf32> to vector<32x64xbf16>
    %cst_15 = arith.constant dense<0.000000e+00> : vector<32x64xf32>
    %15 = tpu.matmul %14, %13, %cst_15 {dimension_numbers = #tpu.dot_dimension_numbers<[1], [0], [0], [1], [0, 0, 1, 1], [], []>} : vector<32x64xbf16>, vector<64x64xbf16>, vector<32x64xf32> -> vector<32x64xf32>
    %cst_16 = arith.constant dense<0.000000e+00> : vector<16x64xf32>
    %16 = tpu.matmul %12, %15, %cst_16 {dimension_numbers = #tpu.dot_dimension_numbers<[1], [0], [0], [1], [0, 0, 1, 1], [], []>} : vector<16x32xf32>, vector<32x64xf32>, vector<16x64xf32> -> vector<16x64xf32>
    %17 = arith.addf %11, %16 : vector<16x64xf32>
    %c0_17 = arith.constant 0 : index
    %c0_18 = arith.constant 0 : index
    %18 = vector.load %arg6[%c0_17, %c0_18] : memref<16x32xf32, #tpu.memory_space<vmem>>, vector<16x32xf32>
    %c0_19 = arith.constant 0 : index
    %c0_20 = arith.constant 0 : index
    %19 = vector.load %arg9[%c0_19, %c0_20] : memref<64x64xbf16, #tpu.memory_space<vmem>>, vector<64x64xbf16>
    %20 = arith.truncf %6 : vector<32x64xf32> to vector<32x64xbf16>
    %cst_21 = arith.constant dense<0.000000e+00> : vector<32x64xf32>
    %21 = tpu.matmul %20, %19, %cst_21 {dimension_numbers = #tpu.dot_dimension_numbers<[1], [0], [0], [1], [0, 0, 1, 1], [], []>} : vector<32x64xbf16>, vector<64x64xbf16>, vector<32x64xf32> -> vector<32x64xf32>
    %cst_22 = arith.constant dense<0.000000e+00> : vector<16x64xf32>
    %22 = tpu.matmul %18, %21, %cst_22 {dimension_numbers = #tpu.dot_dimension_numbers<[1], [0], [0], [1], [0, 0, 1, 1], [], []>} : vector<16x32xf32>, vector<32x64xf32>, vector<16x64xf32> -> vector<16x64xf32>
    %23 = arith.addf %17, %22 : vector<16x64xf32>
    %c0_23 = arith.constant 0 : index
    %c0_24 = arith.constant 0 : index
    %24 = vector.load %arg11[%c0_23, %c0_24] : memref<1x64xf32, #tpu.memory_space<vmem>>, vector<1x64xf32>
    %25 = vector.broadcast %24 : vector<1x64xf32> to vector<16x64xf32>
    %26 = arith.addf %23, %25 : vector<16x64xf32>
    %cst_25 = arith.constant dense<0.000000e+00> : vector<64xf32>
    %27 = vector.multi_reduction <add>, %26, %cst_25 [0] : vector<16x64xf32> to vector<64xf32>
    %28 = vector.shape_cast %27 : vector<64xf32> to vector<1x64xf32>
    %cst_26 = arith.constant 1.600000e+01 : f32
    %29 = vector.broadcast %cst_26 : f32 to vector<1x64xf32>
    %30 = arith.divf %28, %29 : vector<1x64xf32>
    %31 = arith.mulf %26, %26 : vector<16x64xf32>
    %cst_27 = arith.constant dense<0.000000e+00> : vector<64xf32>
    %32 = vector.multi_reduction <add>, %31, %cst_27 [0] : vector<16x64xf32> to vector<64xf32>
    %33 = vector.shape_cast %32 : vector<64xf32> to vector<1x64xf32>
    %cst_28 = arith.constant 1.600000e+01 : f32
    %34 = vector.broadcast %cst_28 : f32 to vector<1x64xf32>
    %35 = arith.divf %33, %34 : vector<1x64xf32>
    %c0_29 = arith.constant 0 : index
    %c0_30 = arith.constant 0 : index
    %36 = vector.load %arg10[%c0_29, %c0_30] : memref<64x64xf32, #tpu.memory_space<vmem>>, vector<64x64xf32>
    %cst_31 = arith.constant dense<0.000000e+00> : vector<1x64xf32>
    %37 = tpu.matmul %30, %36, %cst_31 {dimension_numbers = #tpu.dot_dimension_numbers<[1], [0], [0], [1], [0, 0, 1, 1], [], []>} : vector<1x64xf32>, vector<64x64xf32>, vector<1x64xf32> -> vector<1x64xf32>
    %c0_32 = arith.constant 0 : index
    %c0_33 = arith.constant 0 : index
    %38 = vector.load %arg10[%c0_32, %c0_33] : memref<64x64xf32, #tpu.memory_space<vmem>>, vector<64x64xf32>
    %cst_34 = arith.constant dense<0.000000e+00> : vector<1x64xf32>
    %39 = tpu.matmul %35, %38, %cst_34 {dimension_numbers = #tpu.dot_dimension_numbers<[1], [0], [0], [1], [0, 0, 1, 1], [], []>} : vector<1x64xf32>, vector<64x64xf32>, vector<1x64xf32> -> vector<1x64xf32>
    %40 = arith.mulf %37, %37 : vector<1x64xf32>
    %41 = arith.subf %39, %40 : vector<1x64xf32>
    %42 = vector.broadcast %37 : vector<1x64xf32> to vector<16x64xf32>
    %43 = arith.subf %26, %42 : vector<16x64xf32>
    %cst_35 = arith.constant 9.99999974E-6 : f32
    %44 = vector.broadcast %cst_35 : f32 to vector<1x64xf32>
    %45 = arith.addf %41, %44 : vector<1x64xf32>
    %46 = math.rsqrt %45 : vector<1x64xf32>
    %47 = vector.broadcast %46 : vector<1x64xf32> to vector<16x64xf32>
    %48 = arith.mulf %43, %47 : vector<16x64xf32>
    %c0_36 = arith.constant 0 : index
    %c0_37 = arith.constant 0 : index
    %49 = vector.load %arg12[%c0_36, %c0_37] : memref<1x64xf32, #tpu.memory_space<vmem>>, vector<1x64xf32>
    %50 = vector.broadcast %49 : vector<1x64xf32> to vector<16x64xf32>
    %51 = arith.mulf %48, %50 : vector<16x64xf32>
    %c0_38 = arith.constant 0 : index
    %c0_39 = arith.constant 0 : index
    %52 = vector.load %arg13[%c0_38, %c0_39] : memref<1x64xf32, #tpu.memory_space<vmem>>, vector<1x64xf32>
    %53 = vector.broadcast %52 : vector<1x64xf32> to vector<16x64xf32>
    %54 = arith.addf %51, %53 : vector<16x64xf32>
    %cst_40 = arith.constant 0.000000e+00 : f32
    %55 = vector.broadcast %cst_40 : f32 to vector<16x64xf32>
    %56 = arith.maximumf %54, %55 : vector<16x64xf32>
    %c0_41 = arith.constant 0 : index
    %c0_42 = arith.constant 0 : index
    %57 = vector.load %arg14[%c0_41, %c0_42] : memref<8x16xf32, #tpu.memory_space<vmem>>, vector<8x16xf32>
    %c0_43 = arith.constant 0 : index
    %c0_44 = arith.constant 0 : index
    %58 = vector.load %arg17[%c0_43, %c0_44] : memref<64x64xbf16, #tpu.memory_space<vmem>>, vector<64x64xbf16>
    %59 = arith.truncf %56 : vector<16x64xf32> to vector<16x64xbf16>
    %cst_45 = arith.constant dense<0.000000e+00> : vector<16x64xf32>
    %60 = tpu.matmul %59, %58, %cst_45 {dimension_numbers = #tpu.dot_dimension_numbers<[1], [0], [0], [1], [0, 0, 1, 1], [], []>} : vector<16x64xbf16>, vector<64x64xbf16>, vector<16x64xf32> -> vector<16x64xf32>
    %cst_46 = arith.constant dense<0.000000e+00> : vector<8x64xf32>
    %61 = tpu.matmul %57, %60, %cst_46 {dimension_numbers = #tpu.dot_dimension_numbers<[1], [0], [0], [1], [0, 0, 1, 1], [], []>} : vector<8x16xf32>, vector<16x64xf32>, vector<8x64xf32> -> vector<8x64xf32>
    %c0_47 = arith.constant 0 : index
    %c0_48 = arith.constant 0 : index
    %62 = vector.load %arg15[%c0_47, %c0_48] : memref<8x16xf32, #tpu.memory_space<vmem>>, vector<8x16xf32>
    %c0_49 = arith.constant 0 : index
    %c0_50 = arith.constant 0 : index
    %63 = vector.load %arg18[%c0_49, %c0_50] : memref<64x64xbf16, #tpu.memory_space<vmem>>, vector<64x64xbf16>
    %64 = arith.truncf %56 : vector<16x64xf32> to vector<16x64xbf16>
    %cst_51 = arith.constant dense<0.000000e+00> : vector<16x64xf32>
    %65 = tpu.matmul %64, %63, %cst_51 {dimension_numbers = #tpu.dot_dimension_numbers<[1], [0], [0], [1], [0, 0, 1, 1], [], []>} : vector<16x64xbf16>, vector<64x64xbf16>, vector<16x64xf32> -> vector<16x64xf32>
    %cst_52 = arith.constant dense<0.000000e+00> : vector<8x64xf32>
    %66 = tpu.matmul %62, %65, %cst_52 {dimension_numbers = #tpu.dot_dimension_numbers<[1], [0], [0], [1], [0, 0, 1, 1], [], []>} : vector<8x16xf32>, vector<16x64xf32>, vector<8x64xf32> -> vector<8x64xf32>
    %67 = arith.addf %61, %66 : vector<8x64xf32>
    %c0_53 = arith.constant 0 : index
    %c0_54 = arith.constant 0 : index
    %68 = vector.load %arg16[%c0_53, %c0_54] : memref<8x16xf32, #tpu.memory_space<vmem>>, vector<8x16xf32>
    %c0_55 = arith.constant 0 : index
    %c0_56 = arith.constant 0 : index
    %69 = vector.load %arg19[%c0_55, %c0_56] : memref<64x64xbf16, #tpu.memory_space<vmem>>, vector<64x64xbf16>
    %70 = arith.truncf %56 : vector<16x64xf32> to vector<16x64xbf16>
    %cst_57 = arith.constant dense<0.000000e+00> : vector<16x64xf32>
    %71 = tpu.matmul %70, %69, %cst_57 {dimension_numbers = #tpu.dot_dimension_numbers<[1], [0], [0], [1], [0, 0, 1, 1], [], []>} : vector<16x64xbf16>, vector<64x64xbf16>, vector<16x64xf32> -> vector<16x64xf32>
    %cst_58 = arith.constant dense<0.000000e+00> : vector<8x64xf32>
    %72 = tpu.matmul %68, %71, %cst_58 {dimension_numbers = #tpu.dot_dimension_numbers<[1], [0], [0], [1], [0, 0, 1, 1], [], []>} : vector<8x16xf32>, vector<16x64xf32>, vector<8x64xf32> -> vector<8x64xf32>
    %73 = arith.addf %67, %72 : vector<8x64xf32>
    %c0_59 = arith.constant 0 : index
    %c0_60 = arith.constant 0 : index
    %74 = vector.load %arg21[%c0_59, %c0_60] : memref<1x64xf32, #tpu.memory_space<vmem>>, vector<1x64xf32>
    %75 = vector.broadcast %74 : vector<1x64xf32> to vector<8x64xf32>
    %76 = arith.addf %73, %75 : vector<8x64xf32>
    %cst_61 = arith.constant dense<0.000000e+00> : vector<64xf32>
    %77 = vector.multi_reduction <add>, %76, %cst_61 [0] : vector<8x64xf32> to vector<64xf32>
    %78 = vector.shape_cast %77 : vector<64xf32> to vector<1x64xf32>
    %cst_62 = arith.constant 8.000000e+00 : f32
    %79 = vector.broadcast %cst_62 : f32 to vector<1x64xf32>
    %80 = arith.divf %78, %79 : vector<1x64xf32>
    %81 = arith.mulf %76, %76 : vector<8x64xf32>
    %cst_63 = arith.constant dense<0.000000e+00> : vector<64xf32>
    %82 = vector.multi_reduction <add>, %81, %cst_63 [0] : vector<8x64xf32> to vector<64xf32>
    %83 = vector.shape_cast %82 : vector<64xf32> to vector<1x64xf32>
    %cst_64 = arith.constant 8.000000e+00 : f32
    %84 = vector.broadcast %cst_64 : f32 to vector<1x64xf32>
    %85 = arith.divf %83, %84 : vector<1x64xf32>
    %c0_65 = arith.constant 0 : index
    %c0_66 = arith.constant 0 : index
    %86 = vector.load %arg20[%c0_65, %c0_66] : memref<64x64xf32, #tpu.memory_space<vmem>>, vector<64x64xf32>
    %cst_67 = arith.constant dense<0.000000e+00> : vector<1x64xf32>
    %87 = tpu.matmul %80, %86, %cst_67 {dimension_numbers = #tpu.dot_dimension_numbers<[1], [0], [0], [1], [0, 0, 1, 1], [], []>} : vector<1x64xf32>, vector<64x64xf32>, vector<1x64xf32> -> vector<1x64xf32>
    %c0_68 = arith.constant 0 : index
    %c0_69 = arith.constant 0 : index
    %88 = vector.load %arg20[%c0_68, %c0_69] : memref<64x64xf32, #tpu.memory_space<vmem>>, vector<64x64xf32>
    %cst_70 = arith.constant dense<0.000000e+00> : vector<1x64xf32>
    %89 = tpu.matmul %85, %88, %cst_70 {dimension_numbers = #tpu.dot_dimension_numbers<[1], [0], [0], [1], [0, 0, 1, 1], [], []>} : vector<1x64xf32>, vector<64x64xf32>, vector<1x64xf32> -> vector<1x64xf32>
    %90 = arith.mulf %87, %87 : vector<1x64xf32>
    %91 = arith.subf %89, %90 : vector<1x64xf32>
    %92 = vector.broadcast %87 : vector<1x64xf32> to vector<8x64xf32>
    %93 = arith.subf %76, %92 : vector<8x64xf32>
    %cst_71 = arith.constant 9.99999974E-6 : f32
    %94 = vector.broadcast %cst_71 : f32 to vector<1x64xf32>
    %95 = arith.addf %91, %94 : vector<1x64xf32>
    %96 = math.rsqrt %95 : vector<1x64xf32>
    %97 = vector.broadcast %96 : vector<1x64xf32> to vector<8x64xf32>
    %98 = arith.mulf %93, %97 : vector<8x64xf32>
    %c0_72 = arith.constant 0 : index
    %c0_73 = arith.constant 0 : index
    %99 = vector.load %arg22[%c0_72, %c0_73] : memref<1x64xf32, #tpu.memory_space<vmem>>, vector<1x64xf32>
    %100 = vector.broadcast %99 : vector<1x64xf32> to vector<8x64xf32>
    %101 = arith.mulf %98, %100 : vector<8x64xf32>
    %c0_74 = arith.constant 0 : index
    %c0_75 = arith.constant 0 : index
    %102 = vector.load %arg23[%c0_74, %c0_75] : memref<1x64xf32, #tpu.memory_space<vmem>>, vector<1x64xf32>
    %103 = vector.broadcast %102 : vector<1x64xf32> to vector<8x64xf32>
    %104 = arith.addf %101, %103 : vector<8x64xf32>
    %cst_76 = arith.constant 0.000000e+00 : f32
    %105 = vector.broadcast %cst_76 : f32 to vector<8x64xf32>
    %106 = arith.maximumf %104, %105 : vector<8x64xf32>
    %c0_77 = arith.constant 0 : index
    %c0_78 = arith.constant 0 : index
    %107 = vector.load %arg24[%c0_77, %c0_78] : memref<8x8xf32, #tpu.memory_space<vmem>>, vector<8x8xf32>
    %cst_79 = arith.constant dense<0.000000e+00> : vector<8x64xf32>
    %108 = tpu.matmul %107, %106, %cst_79 {dimension_numbers = #tpu.dot_dimension_numbers<[1], [0], [0], [1], [0, 0, 1, 1], [], []>} : vector<8x8xf32>, vector<8x64xf32>, vector<8x64xf32> -> vector<8x64xf32>
    %109 = vector.extract_strided_slice %108 {offsets = [0, 0], sizes = [2, 64], strides = [1, 1]} : vector<8x64xf32> to vector<2x64xf32>
    %110 = vector.extract_strided_slice %108 {offsets = [2, 0], sizes = [2, 64], strides = [1, 1]} : vector<8x64xf32> to vector<2x64xf32>
    %111 = vector.extract_strided_slice %108 {offsets = [4, 0], sizes = [2, 64], strides = [1, 1]} : vector<8x64xf32> to vector<2x64xf32>
    %112 = vector.extract_strided_slice %108 {offsets = [6, 0], sizes = [2, 64], strides = [1, 1]} : vector<8x64xf32> to vector<2x64xf32>
    %113 = tpu.concatenate %109, %110, %111, %112 in 1 : vector<2x64xf32>, vector<2x64xf32>, vector<2x64xf32>, vector<2x64xf32> -> vector<2x256xf32>
    %c0_80 = arith.constant 0 : index
    %c0_81 = arith.constant 0 : index
    %114 = vector.load %arg25[%c0_80, %c0_81] : memref<256x128xbf16, #tpu.memory_space<vmem>>, vector<256x128xbf16>
    %115 = arith.truncf %113 : vector<2x256xf32> to vector<2x256xbf16>
    %cst_82 = arith.constant dense<0.000000e+00> : vector<2x128xf32>
    %116 = tpu.matmul %115, %114, %cst_82 {dimension_numbers = #tpu.dot_dimension_numbers<[1], [0], [0], [1], [0, 0, 1, 1], [], []>} : vector<2x256xbf16>, vector<256x128xbf16>, vector<2x128xf32> -> vector<2x128xf32>
    %c0_83 = arith.constant 0 : index
    %c0_84 = arith.constant 0 : index
    %117 = vector.load %arg26[%c0_83, %c0_84] : memref<1x128xf32, #tpu.memory_space<vmem>>, vector<1x128xf32>
    %118 = vector.broadcast %117 : vector<1x128xf32> to vector<2x128xf32>
    %119 = arith.addf %116, %118 : vector<2x128xf32>
    %cst_85 = arith.constant 0.000000e+00 : f32
    %120 = vector.broadcast %cst_85 : f32 to vector<2x128xf32>
    %121 = arith.maximumf %119, %120 : vector<2x128xf32>
    %c0_86 = arith.constant 0 : index
    %c0_87 = arith.constant 0 : index
    %122 = vector.load %arg27[%c0_86, %c0_87] : memref<128x64xbf16, #tpu.memory_space<vmem>>, vector<128x64xbf16>
    %123 = arith.truncf %121 : vector<2x128xf32> to vector<2x128xbf16>
    %cst_88 = arith.constant dense<0.000000e+00> : vector<2x64xf32>
    %124 = tpu.matmul %123, %122, %cst_88 {dimension_numbers = #tpu.dot_dimension_numbers<[1], [0], [0], [1], [0, 0, 1, 1], [], []>} : vector<2x128xbf16>, vector<128x64xbf16>, vector<2x64xf32> -> vector<2x64xf32>
    %c0_89 = arith.constant 0 : index
    %c0_90 = arith.constant 0 : index
    %125 = vector.load %arg28[%c0_89, %c0_90] : memref<1x64xf32, #tpu.memory_space<vmem>>, vector<1x64xf32>
    %126 = vector.broadcast %125 : vector<1x64xf32> to vector<2x64xf32>
    %127 = arith.addf %124, %126 : vector<2x64xf32>
    %128 = vector.extract_strided_slice %127 {offsets = [0, 0], sizes = [2, 32], strides = [1, 1]} : vector<2x64xf32> to vector<2x32xf32>
    %129 = vector.extract_strided_slice %127 {offsets = [0, 32], sizes = [2, 32], strides = [1, 1]} : vector<2x64xf32> to vector<2x32xf32>
    %130 = math.exp %129 : vector<2x32xf32>
    %c0_91 = arith.constant 0 : index
    %c0_92 = arith.constant 0 : index
    %131 = vector.load %arg29[%c0_91, %c0_92] : memref<1x32xf32, #tpu.memory_space<vmem>>, vector<1x32xf32>
    %132 = vector.broadcast %131 : vector<1x32xf32> to vector<2x32xf32>
    %133 = arith.mulf %130, %132 : vector<2x32xf32>
    %134 = arith.addf %128, %133 : vector<2x32xf32>
    %135 = tpu.concatenate %134, %128, %129, %130 in 1 : vector<2x32xf32>, vector<2x32xf32>, vector<2x32xf32>, vector<2x32xf32> -> vector<2x128xf32>
    %c0_93 = arith.constant 0 : index
    %c0_94 = arith.constant 0 : index
    %136 = vector.load %arg30[%c0_93, %c0_94] : memref<2x128xf32, #tpu.memory_space<vmem>>, vector<2x128xf32>
    tpu.vector_store %arg30[%c0_93, %c0_94], %135 {strides = array<i32>} : memref<2x128xf32, #tpu.memory_space<vmem>>, vector<2x128xf32>,
    return
  }
  func.func @transform_0(%arg0: i32) -> (i32, i32) {
    %c0_i32 = arith.constant 0 : i32
    %c0_i32_0 = arith.constant 0 : i32
    %c0_i32_1 = arith.constant 0 : i32
    return %c0_i32, %c0_i32_0 : i32, i32
  }
  func.func @transform_1(%arg0: i32) -> (i32, i32) {
    %c0_i32 = arith.constant 0 : i32
    %c0_i32_0 = arith.constant 0 : i32
    %c0_i32_1 = arith.constant 0 : i32
    return %c0_i32, %c0_i32_0 : i32, i32
  }
  func.func @transform_2(%arg0: i32) -> (i32, i32) {
    %c0_i32 = arith.constant 0 : i32
    %c0_i32_0 = arith.constant 0 : i32
    %c0_i32_1 = arith.constant 0 : i32
    return %c0_i32, %c0_i32_0 : i32, i32
  }
  func.func @transform_3(%arg0: i32) -> (i32, i32) {
    %c0_i32 = arith.constant 0 : i32
    %c0_i32_0 = arith.constant 0 : i32
    %c0_i32_1 = arith.constant 0 : i32
    return %c0_i32, %c0_i32_0 : i32, i32
  }
  func.func @transform_4(%arg0: i32) -> (i32, i32) {
    %c0_i32 = arith.constant 0 : i32
    %c0_i32_0 = arith.constant 0 : i32
    %c0_i32_1 = arith.constant 0 : i32
    return %c0_i32, %c0_i32_0 : i32, i32
  }
  func.func @transform_5(%arg0: i32) -> (i32, i32) {
    %c0_i32 = arith.constant 0 : i32
    %c0_i32_0 = arith.constant 0 : i32
    %c0_i32_1 = arith.constant 0 : i32
    return %c0_i32, %c0_i32_0 : i32, i32
  }
  func.func @transform_6(%arg0: i32) -> (i32, i32) {
    %c0_i32 = arith.constant 0 : i32
    %c0_i32_0 = arith.constant 0 : i32
    %c0_i32_1 = arith.constant 0 : i32
    return %c0_i32, %c0_i32_0 : i32, i32
  }
  func.func @transform_7(%arg0: i32) -> (i32, i32) {
    %c0_i32 = arith.constant 0 : i32
    %c0_i32_0 = arith.constant 0 : i32
    %c0_i32_1 = arith.constant 0 : i32
    return %c0_i32, %c0_i32_0 : i32, i32
  }
  func.func @transform_8(%arg0: i32) -> (i32, i32) {
    %c0_i32 = arith.constant 0 : i32
    %c0_i32_0 = arith.constant 0 : i32
    %c0_i32_1 = arith.constant 0 : i32
    return %c0_i32, %c0_i32_0 : i32, i32
  }
  func.func @transform_9(%arg0: i32) -> (i32, i32) {
    %c0_i32 = arith.constant 0 : i32
    %c0_i32_0 = arith.constant 0 : i32
    %c0_i32_1 = arith.constant 0 : i32
    return %c0_i32, %c0_i32_0 : i32, i32
  }
  func.func @transform_10(%arg0: i32) -> (i32, i32) {
    %c0_i32 = arith.constant 0 : i32
    %c0_i32_0 = arith.constant 0 : i32
    %c0_i32_1 = arith.constant 0 : i32
    return %c0_i32, %c0_i32_0 : i32, i32
  }
  func.func @transform_11(%arg0: i32) -> (i32, i32) {
    %c0_i32 = arith.constant 0 : i32
    %c0_i32_0 = arith.constant 0 : i32
    %c0_i32_1 = arith.constant 0 : i32
    return %c0_i32, %c0_i32_0 : i32, i32
  }
  func.func @transform_12(%arg0: i32) -> (i32, i32) {
    %c0_i32 = arith.constant 0 : i32
    %c0_i32_0 = arith.constant 0 : i32
    %c0_i32_1 = arith.constant 0 : i32
    return %c0_i32, %c0_i32_0 : i32, i32
  }
  func.func @transform_13(%arg0: i32) -> (i32, i32) {
    %c0_i32 = arith.constant 0 : i32
    %c0_i32_0 = arith.constant 0 : i32
    %c0_i32_1 = arith.constant 0 : i32
    return %c0_i32, %c0_i32_0 : i32, i32
  }
  func.func @transform_14(%arg0: i32) -> (i32, i32) {
    %c0_i32 = arith.constant 0 : i32
    %c0_i32_0 = arith.constant 0 : i32
    %c0_i32_1 = arith.constant 0 : i32
    return %c0_i32, %c0_i32_0 : i32, i32
  }
  func.func @transform_15(%arg0: i32) -> (i32, i32) {
    %c0_i32 = arith.constant 0 : i32
    %c0_i32_0 = arith.constant 0 : i32
    %c0_i32_1 = arith.constant 0 : i32
    return %c0_i32, %c0_i32_0 : i32, i32
  }
  func.func @transform_16(%arg0: i32) -> (i32, i32) {
    %c0_i32 = arith.constant 0 : i32
    %c0_i32_0 = arith.constant 0 : i32
    %c0_i32_1 = arith.constant 0 : i32
    return %c0_i32, %c0_i32_0 : i32, i32
  }
  func.func @transform_17(%arg0: i32) -> (i32, i32) {
    %c0_i32 = arith.constant 0 : i32
    %c0_i32_0 = arith.constant 0 : i32
    %c0_i32_1 = arith.constant 0 : i32
    return %c0_i32, %c0_i32_0 : i32, i32
  }
  func.func @transform_18(%arg0: i32) -> (i32, i32) {
    %c0_i32 = arith.constant 0 : i32
    %c0_i32_0 = arith.constant 0 : i32
    %c0_i32_1 = arith.constant 0 : i32
    return %c0_i32, %c0_i32_0 : i32, i32
  }
  func.func @transform_19(%arg0: i32) -> (i32, i32) {
    %c0_i32 = arith.constant 0 : i32
    %c0_i32_0 = arith.constant 0 : i32
    %c0_i32_1 = arith.constant 0 : i32
    return %c0_i32, %c0_i32_0 : i32, i32
  }
  func.func @transform_20(%arg0: i32) -> (i32, i32) {
    %c0_i32 = arith.constant 0 : i32
    %c0_i32_0 = arith.constant 0 : i32
    %c0_i32_1 = arith.constant 0 : i32
    return %c0_i32, %c0_i32_0 : i32, i32
  }
  func.func @transform_21(%arg0: i32) -> (i32, i32) {
    %c0_i32 = arith.constant 0 : i32
    %c0_i32_0 = arith.constant 0 : i32
    %c0_i32_1 = arith.constant 0 : i32
    return %c0_i32, %c0_i32_0 : i32, i32
  }
  func.func @transform_22(%arg0: i32) -> (i32, i32) {
    %c0_i32 = arith.constant 0 : i32
    %c0_i32_0 = arith.constant 0 : i32
    %c0_i32_1 = arith.constant 0 : i32
    return %c0_i32, %c0_i32_0 : i32, i32
  }
  func.func @transform_23(%arg0: i32) -> (i32, i32) {
    %c0_i32 = arith.constant 0 : i32
    %c0_i32_0 = arith.constant 0 : i32
    %c0_i32_1 = arith.constant 0 : i32
    return %c0_i32, %c0_i32_0 : i32, i32
  }
  func.func @transform_24(%arg0: i32) -> (i32, i32) {
    %c0_i32 = arith.constant 0 : i32
    %c0_i32_0 = arith.constant 0 : i32
    %c0_i32_1 = arith.constant 0 : i32
    return %c0_i32, %c0_i32_0 : i32, i32
  }
  func.func @transform_25(%arg0: i32) -> (i32, i32) {
    %c0_i32 = arith.constant 0 : i32
    %c0_i32_0 = arith.constant 0 : i32
    %c0_i32_1 = arith.constant 0 : i32
    return %c0_i32, %c0_i32_0 : i32, i32
  }
  func.func @transform_26(%arg0: i32) -> (i32, i32) {
    %c0_i32 = arith.constant 0 : i32
    %c0_i32_0 = arith.constant 0 : i32
    %c0_i32_1 = arith.constant 0 : i32
    return %c0_i32, %c0_i32_0 : i32, i32
  }
  func.func @transform_27(%arg0: i32) -> (i32, i32) {
    %c0_i32 = arith.constant 0 : i32
    %c0_i32_0 = arith.constant 0 : i32
    %c0_i32_1 = arith.constant 0 : i32
    return %c0_i32, %c0_i32_0 : i32, i32
  }
  func.func @transform_28(%arg0: i32) -> (i32, i32) {
    %c0_i32 = arith.constant 0 : i32
    %c0_i32_0 = arith.constant 0 : i32
    %c0_i32_1 = arith.constant 0 : i32
    return %c0_i32, %c0_i32_0 : i32, i32
  }
  func.func @transform_29(%arg0: i32) -> (i32, i32) {
    %c0_i32 = arith.constant 0 : i32
    %c0_i32_0 = arith.constant 0 : i32
    %c0_i32_1 = arith.constant 0 : i32
    return %c0_i32, %c0_i32_0 : i32, i32
  }
}

</mosaic_0001>

<llo_original>
// kernel: forward.1
$region0: #{forward.1}
  #allocation0 [shape = 'u32[]', space=smem, size = 0x4, offset = 0x4, fixed_abs, tag = 'smem constant byte address 0x4 - core index']
  #allocation1 [shape = 'u32[144,128]{1,0:T(1,128)}', space=vmem, size = 0x12000, scoped, tag = 'internal scratch']
  %s0 = inlined_call_operand.smem [shape: u32[30], index: -1, kind: input, shape index: {}]
  %s1 = sld [smem:[%s0]]
  %s2 = scalar_lea.smem %s0, 1
  %s3 = sld [smem:[%s2]]
  %s4 = scalar_lea.smem %s0, 2
  %s5 = sld [smem:[%s4]]
  %s6 = scalar_lea.smem %s0, 3
  %s7 = sld [smem:[%s6]]
  %s8 = scalar_lea.smem %s0, 4
  %s9 = sld [smem:[%s8]]
  %s10 = scalar_lea.smem %s0, 5
  %s11 = sld [smem:[%s10]]
  %s12 = scalar_lea.smem %s0, 6
  %s13 = sld [smem:[%s12]]
  %s14 = scalar_lea.smem %s0, 7
  %s15 = sld [smem:[%s14]]
  %s16 = scalar_lea.smem %s0, 8
  %s17 = sld [smem:[%s16]]
  %s18 = scalar_lea.smem %s0, 9
  %s19 = sld [smem:[%s18]]
  %s20 = scalar_lea.smem %s0, 10
  %s21 = sld [smem:[%s20]]
  %s22 = scalar_lea.smem %s0, 11
  %s23 = sld [smem:[%s22]]
  %s24 = scalar_lea.smem %s0, 12
  %s25 = sld [smem:[%s24]]
  %s26 = scalar_lea.smem %s0, 13
  %s27 = sld [smem:[%s26]]
  %s28 = scalar_lea.smem %s0, 14
  %s29 = sld [smem:[%s28]]
  %s30 = scalar_lea.smem %s0, 15
  %s31 = sld [smem:[%s30]]
  %s32 = scalar_lea.smem %s0, 16
  %s33 = sld [smem:[%s32]]
  %s34 = scalar_lea.smem %s0, 17
  %s35 = sld [smem:[%s34]]
  %s36 = scalar_lea.smem %s0, 18
  %s37 = sld [smem:[%s36]]
  %s38 = scalar_lea.smem %s0, 19
  %s39 = sld [smem:[%s38]]
  %s40 = scalar_lea.smem %s0, 20
  %s41 = sld [smem:[%s40]]
  %s42 = scalar_lea.smem %s0, 21
  %s43 = sld [smem:[%s42]]
  %s44 = scalar_lea.smem %s0, 22
  %s45 = sld [smem:[%s44]]
  %s46 = scalar_lea.smem %s0, 23
  %s47 = sld [smem:[%s46]]
  %s48 = scalar_lea.smem %s0, 24
  %s49 = sld [smem:[%s48]]
  %s50 = scalar_lea.smem %s0, 25
  %s51 = sld [smem:[%s50]]
  %s52 = scalar_lea.smem %s0, 26
  %s53 = sld [smem:[%s52]]
  %s54 = scalar_lea.smem %s0, 27
  %s55 = sld [smem:[%s54]]
  %s56 = scalar_lea.smem %s0, 28
  %s57 = sld [smem:[%s56]]
  %s58 = scalar_lea.smem %s0, 29
  %s59 = sld [smem:[%s58]]
  %s60 = sld [smem:[#allocation0]]
  $region166: #{forward.1} parent=0
    _
  %s62 = ssub.s32 1, %s60
  %s63 = scalar_select 0, %s62, %s60
  $region1: #{forward.1} parent=0
    #allocation2 [shape = 'u8[8192]{0}', space=vmem, size = 0x2000, scoped, tag = 'input window, operand 4, single buffered']
    #allocation3 [shape = 's32[1]{0}', space=sflag, size = 0x4, scoped, tag = 'scoped memory for forward.1']
    #allocation4 [shape = 'u8[8192]{0}', space=vmem, size = 0x2000, scoped, tag = 'input window, operand 5, single buffered']
    #allocation5 [shape = 's32[1]{0}', space=sflag, size = 0x4, scoped, tag = 'scoped memory for forward.1']
    #allocation6 [shape = 'u8[4096]{0}', space=vmem, size = 0x1000, scoped, tag = 'input window, operand 13, single buffered']
    #allocation7 [shape = 'u8[4096]{0}', space=vmem, size = 0x1000, scoped, tag = 'input window, operand 14, single buffered']
    #allocation8 [shape = 's32[1]{0}', space=sflag, size = 0x4, scoped, tag = 'scoped memory for forward.1']
    #allocation9 [shape = 'u8[4096]{0}', space=vmem, size = 0x1000, scoped, tag = 'input window, operand 15, single buffered']
    #allocation10 [shape = 'u8[16384]{0}', space=vmem, size = 0x4000, scoped, tag = 'input window, operand 16, single buffered']
    #allocation11 [shape = 's32[1]{0}', space=sflag, size = 0x4, scoped, tag = 'scoped memory for forward.1']
    #allocation12 [shape = 'u8[16384]{0}', space=vmem, size = 0x4000, scoped, tag = 'input window, operand 17, single buffered']
    #allocation13 [shape = 'u8[16384]{0}', space=vmem, size = 0x4000, scoped, tag = 'input window, operand 18, single buffered']
    #allocation14 [shape = 's32[1]{0}', space=sflag, size = 0x4, scoped, tag = 'scoped memory for forward.1']
    #allocation15 [shape = 'u8[4096]{0}', space=vmem, size = 0x1000, scoped, tag = 'input window, operand 23, single buffered']
    #allocation16 [shape = 'u8[512]{0}', space=vmem, size = 0x400, scoped, tag = 'input window, operand 28, single buffered']
    #allocation17 [shape = 's32[1]{0}', space=sflag, size = 0x4, scoped, tag = 'scoped memory for forward.1']
    %64 = vsyncpa [#allocation3], 0
    %65 = vsyncpa [#allocation5], 0
    %66 = vsyncpa [#allocation8], 0
    %67 = vsyncpa [#allocation11], 0
    %68 = vsyncpa [#allocation14], 0
    %69 = vsyncpa [#allocation17], 0
    // Predicated region
    $region2: #{forward.1} parent=1 // pred_check
      _
    $region3: #{forward.1} parent=1 // pred_check_branch
      %71 = sbr.rel (0) target = $region5
    $region4: #{forward.1} parent=1 // pred_region
      _
    $region5: #{forward.1} parent=1 // pred_fallthru
      _
    // Predicated region
    $region6: #{forward.1} parent=1 // pred_check
      _
    $region7: #{forward.1} parent=1 // pred_check_branch
      %73 = sbr.rel (0) target = $region9
    $region8: #{forward.1} parent=1 // pred_region
      _
    $region9: #{forward.1} parent=1 // pred_fallthru
      _
    // Predicated region
    $region10: #{forward.1} parent=1 // pred_check
      _
    $region11: #{forward.1} parent=1 // pred_check_branch
      %75 = sbr.rel (0) target = $region13
    $region12: #{forward.1} parent=1 // pred_region
      _
    $region13: #{forward.1} parent=1 // pred_fallthru
      _
    // Predicated region
    $region14: #{forward.1} parent=1 // pred_check
      _
    $region15: #{forward.1} parent=1 // pred_check_branch
      %77 = sbr.rel (0) target = $region17
    $region16: #{forward.1} parent=1 // pred_region
      _
    $region17: #{forward.1} parent=1 // pred_fallthru
      _
    // Predicated region
    $region18: #{forward.1} parent=1 // pred_check
      _
    $region19: #{forward.1} parent=1 // pred_check_branch
      %79 = sbr.rel (0) target = $region21
    $region20: #{forward.1} parent=1 // pred_region
      %s81 = ssub.s32 256, 256
      %82 = vsyncadd [#allocation3], %s81
      %s83 = sshll.u32 [#allocation2], 4
      %s84 = int_to_ptr.vmem [resolvable:$true] %s83
      %89 = dma.hbm_to_vmem [thread:$0]  %s9, 256, %s84, [#allocation3], 128, 128, 8
    $region21: #{forward.1} parent=1 // pred_fallthru
      _
    // Predicated region
    $region22: #{forward.1} parent=1 // pred_check
      _
    $region23: #{forward.1} parent=1 // pred_check_branch
      %91 = sbr.rel (0) target = $region25
    $region24: #{forward.1} parent=1 // pred_region
      %s93 = ssub.s32 256, 256
      %94 = vsyncadd [#allocation5], %s93
      %s95 = sshll.u32 [#allocation4], 4
      %s96 = int_to_ptr.vmem [resolvable:$true] %s95
      %101 = dma.hbm_to_vmem [thread:$0]  %s11, 256, %s96, [#allocation5], 128, 128, 8
    $region25: #{forward.1} parent=1 // pred_fallthru
      _
    // Predicated region
    $region26: #{forward.1} parent=1 // pred_check
      _
    $region27: #{forward.1} parent=1 // pred_check_branch
      %103 = sbr.rel (0) target = $region29
    $region28: #{forward.1} parent=1 // pred_region
      _
    $region29: #{forward.1} parent=1 // pred_fallthru
      _
    // Predicated region
    $region30: #{forward.1} parent=1 // pred_check
      _
    $region31: #{forward.1} parent=1 // pred_check_branch
      %105 = sbr.rel (0) target = $region33
    $region32: #{forward.1} parent=1 // pred_region
      _
    $region33: #{forward.1} parent=1 // pred_fallthru
      _
    // Predicated region
    $region34: #{forward.1} parent=1 // pred_check
      _
    $region35: #{forward.1} parent=1 // pred_check_branch
      %107 = sbr.rel (0) target = $region37
    $region36: #{forward.1} parent=1 // pred_region
      _
    $region37: #{forward.1} parent=1 // pred_fallthru
      _
    // Predicated region
    $region38: #{forward.1} parent=1 // pred_check
      _
    $region39: #{forward.1} parent=1 // pred_check_branch
      %109 = sbr.rel (0) target = $region41
    $region40: #{forward.1} parent=1 // pred_region
      _
    $region41: #{forward.1} parent=1 // pred_fallthru
      _
    // Predicated region
    $region42: #{forward.1} parent=1 // pred_check
      _
    $region43: #{forward.1} parent=1 // pred_check_branch
      %111 = sbr.rel (0) target = $region45
    $region44: #{forward.1} parent=1 // pred_region
      _
    $region45: #{forward.1} parent=1 // pred_fallthru
      _
    // Predicated region
    $region46: #{forward.1} parent=1 // pred_check
      _
    $region47: #{forward.1} parent=1 // pred_check_branch
      %113 = sbr.rel (0) target = $region49
    $region48: #{forward.1} parent=1 // pred_region
      _
    $region49: #{forward.1} parent=1 // pred_fallthru
      _
    // Predicated region
    $region50: #{forward.1} parent=1 // pred_check
      _
    $region51: #{forward.1} parent=1 // pred_check_branch
      %115 = sbr.rel (0) target = $region53
    $region52: #{forward.1} parent=1 // pred_region
      _
    $region53: #{forward.1} parent=1 // pred_fallthru
      _
    // Predicated region
    $region54: #{forward.1} parent=1 // pred_check
      _
    $region55: #{forward.1} parent=1 // pred_check_branch
      %117 = sbr.rel (0) target = $region57
    $region56: #{forward.1} parent=1 // pred_region
      %s119 = ssub.s32 128, 128
      %120 = vsyncadd [#allocation5], %s119
      %s122 = sshll.u32 [#allocation6], 4
      %s123 = int_to_ptr.vmem [resolvable:$true] %s122
      %125 = dma.hbm_to_vmem [thread:$0]  %s27, 128, %s123, [#allocation5]
    $region57: #{forward.1} parent=1 // pred_fallthru
      _
    // Predicated region
    $region58: #{forward.1} parent=1 // pred_check
      _
    $region59: #{forward.1} parent=1 // pred_check_branch
      %127 = sbr.rel (0) target = $region61
    $region60: #{forward.1} parent=1 // pred_region
      %s129 = ssub.s32 128, 128
      %130 = vsyncadd [#allocation8], %s129
      %s132 = sshll.u32 [#allocation7], 4
      %s133 = int_to_ptr.vmem [resolvable:$true] %s132
      %135 = dma.hbm_to_vmem [thread:$0]  %s29, 128, %s133, [#allocation8]
    $region61: #{forward.1} parent=1 // pred_fallthru
      _
    // Predicated region
    $region62: #{forward.1} parent=1 // pred_check
      _
    $region63: #{forward.1} parent=1 // pred_check_branch
      %137 = sbr.rel (0) target = $region65
    $region64: #{forward.1} parent=1 // pred_region
      %s139 = ssub.s32 128, 128
      %140 = vsyncadd [#allocation8], %s139
      %s142 = sshll.u32 [#allocation9], 4
      %s143 = int_to_ptr.vmem [resolvable:$true] %s142
      %145 = dma.hbm_to_vmem [thread:$0]  %s31, 128, %s143, [#allocation8]
    $region65: #{forward.1} parent=1 // pred_fallthru
      _
    // Predicated region
    $region66: #{forward.1} parent=1 // pred_check
      _
    $region67: #{forward.1} parent=1 // pred_check_branch
      %147 = sbr.rel (0) target = $region69
    $region68: #{forward.1} parent=1 // pred_region
      %s149 = ssub.s32 512, 512
      %150 = vsyncadd [#allocation11], %s149
      %s151 = sshll.u32 [#allocation10], 4
      %s152 = int_to_ptr.vmem [resolvable:$true] %s151
      %157 = dma.hbm_to_vmem [thread:$0]  %s33, 512, %s152, [#allocation11], 64, 64, 4
    $region69: #{forward.1} parent=1 // pred_fallthru
      _
    // Predicated region
    $region70: #{forward.1} parent=1 // pred_check
      _
    $region71: #{forward.1} parent=1 // pred_check_branch
      %159 = sbr.rel (0) target = $region73
    $region72: #{forward.1} parent=1 // pred_region
      %s161 = ssub.s32 512, 512
      %162 = vsyncadd [#allocation11], %s161
      %s163 = sshll.u32 [#allocation12], 4
      %s164 = int_to_ptr.vmem [resolvable:$true] %s163
      %169 = dma.hbm_to_vmem [thread:$0]  %s35, 512, %s164, [#allocation11], 64, 64, 4
    $region73: #{forward.1} parent=1 // pred_fallthru
      _
    // Predicated region
    $region74: #{forward.1} parent=1 // pred_check
      _
    $region75: #{forward.1} parent=1 // pred_check_branch
      %171 = sbr.rel (0) target = $region77
    $region76: #{forward.1} parent=1 // pred_region
      %s173 = ssub.s32 512, 512
      %174 = vsyncadd [#allocation14], %s173
      %s175 = sshll.u32 [#allocation13], 4
      %s176 = int_to_ptr.vmem [resolvable:$true] %s175
      %181 = dma.hbm_to_vmem [thread:$0]  %s37, 512, %s176, [#allocation14], 64, 64, 4
    $region77: #{forward.1} parent=1 // pred_fallthru
      _
    // Predicated region
    $region78: #{forward.1} parent=1 // pred_check
      _
    $region79: #{forward.1} parent=1 // pred_check_branch
      %183 = sbr.rel (0) target = $region81
    $region80: #{forward.1} parent=1 // pred_region
      _
    $region81: #{forward.1} parent=1 // pred_fallthru
      _
    // Predicated region
    $region82: #{forward.1} parent=1 // pred_check
      _
    $region83: #{forward.1} parent=1 // pred_check_branch
      %185 = sbr.rel (0) target = $region85
    $region84: #{forward.1} parent=1 // pred_region
      _
    $region85: #{forward.1} parent=1 // pred_fallthru
      _
    // Predicated region
    $region86: #{forward.1} parent=1 // pred_check
      _
    $region87: #{forward.1} parent=1 // pred_check_branch
      %187 = sbr.rel (0) target = $region89
    $region88: #{forward.1} parent=1 // pred_region
      _
    $region89: #{forward.1} parent=1 // pred_fallthru
      _
    // Predicated region
    $region90: #{forward.1} parent=1 // pred_check
      _
    $region91: #{forward.1} parent=1 // pred_check_branch
      %189 = sbr.rel (0) target = $region93
    $region92: #{forward.1} parent=1 // pred_region
      _
    $region93: #{forward.1} parent=1 // pred_fallthru
      _
    // Predicated region
    $region94: #{forward.1} parent=1 // pred_check
      _
    $region95: #{forward.1} parent=1 // pred_check_branch
      %191 = sbr.rel (0) target = $region97
    $region96: #{forward.1} parent=1 // pred_region
      %s193 = ssub.s32 128, 128
      %194 = vsyncadd [#allocation14], %s193
      %s196 = sshll.u32 [#allocation15], 4
      %s197 = int_to_ptr.vmem [resolvable:$true] %s196
      %199 = dma.hbm_to_vmem [thread:$0]  %s47, 128, %s197, [#allocation14]
    $region97: #{forward.1} parent=1 // pred_fallthru
      _
    // Predicated region
    $region98: #{forward.1} parent=1 // pred_check
      _
    $region99: #{forward.1} parent=1 // pred_check_branch
      %201 = sbr.rel (0) target = $region101
    $region100: #{forward.1} parent=1 // pred_region
      _
    $region101: #{forward.1} parent=1 // pred_fallthru
      _
    // Predicated region
    $region102: #{forward.1} parent=1 // pred_check
      _
    $region103: #{forward.1} parent=1 // pred_check_branch
      %203 = sbr.rel (0) target = $region105
    $region104: #{forward.1} parent=1 // pred_region
      _
    $region105: #{forward.1} parent=1 // pred_fallthru
      _
    // Predicated region
    $region106: #{forward.1} parent=1 // pred_check
      _
    $region107: #{forward.1} parent=1 // pred_check_branch
      %205 = sbr.rel (0) target = $region109
    $region108: #{forward.1} parent=1 // pred_region
      _
    $region109: #{forward.1} parent=1 // pred_fallthru
      _
    // Predicated region
    $region110: #{forward.1} parent=1 // pred_check
      _
    $region111: #{forward.1} parent=1 // pred_check_branch
      %207 = sbr.rel (0) target = $region113
    $region112: #{forward.1} parent=1 // pred_region
      _
    $region113: #{forward.1} parent=1 // pred_fallthru
      _
    // Predicated region
    $region114: #{forward.1} parent=1 // pred_check
      _
    $region115: #{forward.1} parent=1 // pred_check_branch
      %209 = sbr.rel (0) target = $region117
    $region116: #{forward.1} parent=1 // pred_region
      %s211 = ssub.s32 16, 16
      %212 = vsyncadd [#allocation17], %s211
      %s214 = sshll.u32 [#allocation16], 4
      %s215 = int_to_ptr.vmem [resolvable:$true] %s214
      %217 = dma.hbm_to_vmem [thread:$0]  %s57, 16, %s215, [#allocation17]
    $region117: #{forward.1} parent=1 // pred_fallthru
      _
    // Predicated region
    $region118: #{forward.1} parent=1 // pred_check
      _
    $region119: #{forward.1} parent=1 // pred_check_branch
      %219 = sbr.rel (0) target = $region121
    $region120: #{forward.1} parent=1 // pred_region
      %220 = dma.done [#allocation3], 256
    $region121: #{forward.1} parent=1 // pred_fallthru
      _
    // Predicated region
    $region122: #{forward.1} parent=1 // pred_check
      _
    $region123: #{forward.1} parent=1 // pred_check_branch
      %222 = sbr.rel (0) target = $region125
    $region124: #{forward.1} parent=1 // pred_region
      %223 = dma.done [#allocation5], 256
    $region125: #{forward.1} parent=1 // pred_fallthru
      _
    // Predicated region
    $region126: #{forward.1} parent=1 // pred_check
      _
    $region127: #{forward.1} parent=1 // pred_check_branch
      %225 = sbr.rel (0) target = $region129
    $region128: #{forward.1} parent=1 // pred_region
      %226 = dma.done [#allocation5], 128
    $region129: #{forward.1} parent=1 // pred_fallthru
      _
    // Predicated region
    $region130: #{forward.1} parent=1 // pred_check
      _
    $region131: #{forward.1} parent=1 // pred_check_branch
      %228 = sbr.rel (0) target = $region133
    $region132: #{forward.1} parent=1 // pred_region
      %229 = dma.done [#allocation8], 128
    $region133: #{forward.1} parent=1 // pred_fallthru
      _
    // Predicated region
    $region134: #{forward.1} parent=1 // pred_check
      _
    $region135: #{forward.1} parent=1 // pred_check_branch
      %231 = sbr.rel (0) target = $region137
    $region136: #{forward.1} parent=1 // pred_region
      %232 = dma.done [#allocation8], 128
    $region137: #{forward.1} parent=1 // pred_fallthru
      _
    // Predicated region
    $region138: #{forward.1} parent=1 // pred_check
      _
    $region139: #{forward.1} parent=1 // pred_check_branch
      %234 = sbr.rel (0) target = $region141
    $region140: #{forward.1} parent=1 // pred_region
      %235 = dma.done [#allocation11], 512
    $region141: #{forward.1} parent=1 // pred_fallthru
      _
    // Predicated region
    $region142: #{forward.1} parent=1 // pred_check
      _
    $region143: #{forward.1} parent=1 // pred_check_branch
      %237 = sbr.rel (0) target = $region145
    $region144: #{forward.1} parent=1 // pred_region
      %238 = dma.done [#allocation11], 512
    $region145: #{forward.1} parent=1 // pred_fallthru
      _
    // Predicated region
    $region146: #{forward.1} parent=1 // pred_check
      _
    $region147: #{forward.1} parent=1 // pred_check_branch
      %240 = sbr.rel (0) target = $region149
    $region148: #{forward.1} parent=1 // pred_region
      %241 = dma.done [#allocation14], 512
    $region149: #{forward.1} parent=1 // pred_fallthru
      _
    // Predicated region
    $region150: #{forward.1} parent=1 // pred_check
      _
    $region151: #{forward.1} parent=1 // pred_check_branch
      %243 = sbr.rel (0) target = $region153
    $region152: #{forward.1} parent=1 // pred_region
      %244 = dma.done [#allocation14], 128
    $region153: #{forward.1} parent=1 // pred_fallthru
      _
    // Predicated region
    $region154: #{forward.1} parent=1 // pred_check
      _
    $region155: #{forward.1} parent=1 // pred_check_branch
      %246 = sbr.rel (0) target = $region157
    $region156: #{forward.1} parent=1 // pred_region
      %247 = dma.done [#allocation17], 16
    $region157: #{forward.1} parent=1 // pred_fallthru
      _
    %v249 = vld [vmem:[%s1] sm:$0xff]
    %v250 = vld [vmem:[%s1 + $0x8] sm:$0xff]
    %v251 = vld [vmem:[%s1 + $0x10] sm:$0xff]
    %v252 = vld [vmem:[%s1 + $0x18] sm:$0xff]
    %v253 = vld [vmem:[%s3] sm:$0xf]
    %v254 = vld [vmem:[%s3 + $0x4] sm:$0xf]
    %v255 = vld [vmem:[%s3 + $0x8] sm:$0xf]
    %v256 = vld [vmem:[%s3 + $0xc] sm:$0xf]
    %v257 = vld [vmem:[%s3 + $0x10] sm:$0xf]
    %v258 = vld [vmem:[%s3 + $0x14] sm:$0xf]
    %v259 = vpack.c.bf16 %v250, %v249
    %v260 = vpack.c.bf16 %v252, %v251
    %v261 = vld [vmem:[%s5] sm:$0x1]
    %v263 = vlaneseq
    %v264 = vshrl.u32 %v263, 7
    %v265 = vsub.s32 0, %v264
    %v266 = vrot.slane %v261, %v265
    %v274 = vunpack.c.l.b16 %v253
    %v275 = vunpack.c.l.b16 %v254
    %v276 = vunpack.c.l.b16 %v255
    %v277 = vunpack.c.l.b16 %v256
    %v278 = vunpack.c.l.b16 %v257
    %v279 = vunpack.c.l.b16 %v258
    %v280 = vpack.c.b16 %v275, %v274
    %v281 = vpack.c.b16 %v277, %v276
    %v282 = vpack.c.b16 %v279, %v278
    %vm286 = vcmask 392192
    %v288 = vsel %vm286, %v259, 0
    %v291 = vsel %vm286, %v260, 0
    %293 = vmatprep.subr.bf16.mxu0 0
    %294 = vmatpush1.bf16.msra.mxu0 0
    %295 = vmatprep.subr.bf16.mxu0 0
    %296 = vmatpush1.bf16.msra.mxu0 0
    %297 = vmatprep.subr.bf16.mxu0 0
    %298 = vmatpush1.bf16.msra.mxu0 0
    %299 = vmatprep.subr.bf16.mxu0 0
    %300 = vmatpush1.bf16.msra.mxu0 0
    %301 = vmatprep.subr.bf16.mxu0 0
    %302 = vmatpush1.bf16.msra.mxu0 0
    %303 = vmatprep.subr.bf16.mxu0 0
    %304 = vmatpush1.bf16.msra.mxu0 %v282
    %305 = vmatprep.subr.bf16.mxu0 0
    %306 = vmatpush1.bf16.msra.mxu0 %v281
    %307 = vmatprep.subr.bf16.mxu0 0
    %308 = vmatpush1.bf16.msra.mxu0 %v280
    %309 = vmatprep.subr.bf16.mxu0 0
    %310 = vmatpush2.bf16.msra.mxu0 0
    %311 = vmatprep.subr.bf16.mxu0 0
    %312 = vmatpush2.bf16.msra.mxu0 0
    %313 = vmatprep.subr.bf16.mxu0 0
    %314 = vmatpush2.bf16.msra.mxu0 0
    %315 = vmatprep.subr.bf16.mxu0 0
    %316 = vmatpush2.bf16.msra.mxu0 0
    %317 = vmatprep.subr.bf16.mxu0 0
    %318 = vmatpush2.bf16.msra.mxu0 0
    %319 = vmatprep.subr.bf16.mxu0 0
    %320 = vmatpush2.bf16.msra.mxu0 0
    %321 = vmatprep.subr.bf16.mxu0 0
    %322 = vmatpush2.bf16.msra.mxu0 0
    %323 = vmatprep.subr.bf16.mxu0 0
    %324 = vmatpush2.bf16.msra.mxu0 0
    %325 = vmatprep.mubr.bf16.mxu0 0
    %326 = vmatmul.mubr.bf16.gmra.mxu0 %v288
    %v327 = vpop.f32.mrf.mxu0
    %v328 = vadd.f32 %v266, %v327
    %v329 = vpop.f32.mrf.mxu0
    %v330 = vpop.f32.mrf.mxu0
    %v331 = vadd.f32 %v266, %v330
    %v332 = vpop.f32.mrf.mxu0
    %333 = vmatprep.mubr.bf16.mxu0 0
    %334 = vmatmul.mubr.bf16.gmra.mxu0 %v291
    %v335 = vpop.f32.mrf.mxu0
    %v336 = vadd.f32 %v266, %v335
    %v337 = vpop.f32.mrf.mxu0
    %v338 = vpop.f32.mrf.mxu0
    %v339 = vadd.f32 %v266, %v338
    %v340 = vpop.f32.mrf.mxu0
    %341 = vdwg.mxu0
    %v342 = vld [vmem:[%s7] sm:$0xff]
    %v343 = vld [vmem:[%s7 + $0x8] sm:$0xff]
    %v344 = vld [vmem:[%s13] sm:$0xf]
    %v345 = vld [vmem:[%s13 + $0x4] sm:$0xf]
    %v346 = vld [vmem:[%s13 + $0x8] sm:$0xf]
    %v347 = vld [vmem:[%s13 + $0xc] sm:$0xf]
    %v348 = vld [vmem:[%s13 + $0x10] sm:$0xf]
    %v349 = vld [vmem:[%s13 + $0x14] sm:$0xf]
    %v350 = vld [vmem:[%s13 + $0x18] sm:$0xf]
    %v351 = vld [vmem:[%s13 + $0x1c] sm:$0xf]
    %v352 = vpack.c.bf16 %v331, %v328
    %v353 = vpack.c.bf16 %v339, %v336
    %v362 = vunpack.c.l.b16 %v344
    %v363 = vunpack.c.l.b16 %v345
    %v364 = vunpack.c.l.b16 %v346
    %v365 = vunpack.c.l.b16 %v347
    %v366 = vunpack.c.l.b16 %v348
    %v367 = vunpack.c.l.b16 %v349
    %v368 = vunpack.c.l.b16 %v350
    %v369 = vunpack.c.l.b16 %v351
    %v370 = vpack.c.b16 %v363, %v362
    %v371 = vpack.c.b16 %v365, %v364
    %v372 = vpack.c.b16 %v367, %v366
    %v373 = vpack.c.b16 %v369, %v368
    %vm378 = vcmask 523264
    %v380 = vsel %vm378, %v352, 0
    %v383 = vsel %vm378, %v353, 0
    %385 = vmatprep.subr.bf16.mxu0 0
    %386 = vmatpush1.bf16.msra.mxu0 0
    %387 = vmatprep.subr.bf16.mxu0 0
    %388 = vmatpush1.bf16.msra.mxu0 0
    %389 = vmatprep.subr.bf16.mxu0 0
    %390 = vmatpush1.bf16.msra.mxu0 0
    %391 = vmatprep.subr.bf16.mxu0 0
    %392 = vmatpush1.bf16.msra.mxu0 0
    %393 = vmatprep.subr.bf16.mxu0 0
    %394 = vmatpush1.bf16.msra.mxu0 %v373
    %395 = vmatprep.subr.bf16.mxu0 0
    %396 = vmatpush1.bf16.msra.mxu0 %v372
    %397 = vmatprep.subr.bf16.mxu0 0
    %398 = vmatpush1.bf16.msra.mxu0 %v371
    %399 = vmatprep.subr.bf16.mxu0 0
    %400 = vmatpush1.bf16.msra.mxu0 %v370
    %401 = vmatprep.subr.bf16.mxu0 0
    %402 = vmatpush2.bf16.msra.mxu0 0
    %403 = vmatprep.subr.bf16.mxu0 0
    %404 = vmatpush2.bf16.msra.mxu0 0
    %405 = vmatprep.subr.bf16.mxu0 0
    %406 = vmatpush2.bf16.msra.mxu0 0
    %407 = vmatprep.subr.bf16.mxu0 0
    %408 = vmatpush2.bf16.msra.mxu0 0
    %409 = vmatprep.subr.bf16.mxu0 0
    %410 = vmatpush2.bf16.msra.mxu0 0
    %411 = vmatprep.subr.bf16.mxu0 0
    %412 = vmatpush2.bf16.msra.mxu0 0
    %413 = vmatprep.subr.bf16.mxu0 0
    %414 = vmatpush2.bf16.msra.mxu0 0
    %415 = vmatprep.subr.bf16.mxu0 0
    %416 = vmatpush2.bf16.msra.mxu0 0
    %417 = vmatprep.mubr.bf16.mxu0 0
    %418 = vmatmul.mubr.bf16.gmra.mxu0 %v380
    %v419 = vpop.f32.mrf.mxu0
    %v420 = vadd.f32 0.0, %v419
    %v421 = vpop.f32.mrf.mxu0
    %v422 = vpop.f32.mrf.mxu0
    %v423 = vadd.f32 0.0, %v422
    %v424 = vpop.f32.mrf.mxu0
    %425 = vmatprep.mubr.bf16.mxu0 0
    %426 = vmatmul.mubr.bf16.gmra.mxu0 %v383
    %v427 = vpop.f32.mrf.mxu0
    %v428 = vadd.f32 0.0, %v427
    %v429 = vpop.f32.mrf.mxu0
    %v430 = vpop.f32.mrf.mxu0
    %v431 = vadd.f32 0.0, %v430
    %v432 = vpop.f32.mrf.mxu0
    %433 = vdwg.mxu0
    %v434 = vld [vmem:[#allocation2] sm:$0xff]
    %v435 = vld [vmem:[#allocation2 + $0x8] sm:$0xff]
    %v436 = vld [vmem:[%s15] sm:$0xf]
    %v437 = vld [vmem:[%s15 + $0x4] sm:$0xf]
    %v438 = vld [vmem:[%s15 + $0x8] sm:$0xf]
    %v439 = vld [vmem:[%s15 + $0xc] sm:$0xf]
    %v440 = vld [vmem:[%s15 + $0x10] sm:$0xf]
    %v441 = vld [vmem:[%s15 + $0x14] sm:$0xf]
    %v442 = vld [vmem:[%s15 + $0x18] sm:$0xf]
    %v443 = vld [vmem:[%s15 + $0x1c] sm:$0xf]
    %v452 = vunpack.c.l.b16 %v436
    %v453 = vunpack.c.l.b16 %v437
    %v454 = vunpack.c.l.b16 %v438
    %v455 = vunpack.c.l.b16 %v439
    %v456 = vunpack.c.l.b16 %v440
    %v457 = vunpack.c.l.b16 %v441
    %v458 = vunpack.c.l.b16 %v442
    %v459 = vunpack.c.l.b16 %v443
    %v460 = vpack.c.b16 %v453, %v452
    %v461 = vpack.c.b16 %v455, %v454
    %v462 = vpack.c.b16 %v457, %v456
    %v463 = vpack.c.b16 %v459, %v458
    %468 = vmatprep.subr.bf16.mxu0 0
    %469 = vmatpush1.bf16.msra.mxu0 0
    %470 = vmatprep.subr.bf16.mxu0 0
    %471 = vmatpush1.bf16.msra.mxu0 0
    %472 = vmatprep.subr.bf16.mxu0 0
    %473 = vmatpush1.bf16.msra.mxu0 0
    %474 = vmatprep.subr.bf16.mxu0 0
    %475 = vmatpush1.bf16.msra.mxu0 0
    %476 = vmatprep.subr.bf16.mxu0 0
    %477 = vmatpush1.bf16.msra.mxu0 %v463
    %478 = vmatprep.subr.bf16.mxu0 0
    %479 = vmatpush1.bf16.msra.mxu0 %v462
    %480 = vmatprep.subr.bf16.mxu0 0
    %481 = vmatpush1.bf16.msra.mxu0 %v461
    %482 = vmatprep.subr.bf16.mxu0 0
    %483 = vmatpush1.bf16.msra.mxu0 %v460
    %484 = vmatprep.subr.bf16.mxu0 0
    %485 = vmatpush2.bf16.msra.mxu0 0
    %486 = vmatprep.subr.bf16.mxu0 0
    %487 = vmatpush2.bf16.msra.mxu0 0
    %488 = vmatprep.subr.bf16.mxu0 0
    %489 = vmatpush2.bf16.msra.mxu0 0
    %490 = vmatprep.subr.bf16.mxu0 0
    %491 = vmatpush2.bf16.msra.mxu0 0
    %492 = vmatprep.subr.bf16.mxu0 0
    %493 = vmatpush2.bf16.msra.mxu0 0
    %494 = vmatprep.subr.bf16.mxu0 0
    %495 = vmatpush2.bf16.msra.mxu0 0
    %496 = vmatprep.subr.bf16.mxu0 0
    %497 = vmatpush2.bf16.msra.mxu0 0
    %498 = vmatprep.subr.bf16.mxu0 0
    %499 = vmatpush2.bf16.msra.mxu0 0
    %500 = vmatprep.mubr.bf16.mxu0 0
    %501 = vmatmul.mubr.bf16.gmra.mxu0 %v380
    %v502 = vpop.f32.mrf.mxu0
    %v503 = vadd.f32 0.0, %v502
    %v504 = vpop.f32.mrf.mxu0
    %v505 = vpop.f32.mrf.mxu0
    %v506 = vadd.f32 0.0, %v505
    %v507 = vpop.f32.mrf.mxu0
    %508 = vmatprep.mubr.bf16.mxu0 0
    %509 = vmatmul.mubr.bf16.gmra.mxu0 %v383
    %v510 = vpop.f32.mrf.mxu0
    %v511 = vadd.f32 0.0, %v510
    %v512 = vpop.f32.mrf.mxu0
    %v513 = vpop.f32.mrf.mxu0
    %v514 = vadd.f32 0.0, %v513
    %v515 = vpop.f32.mrf.mxu0
    %516 = vdwg.mxu0
    %vm517 = vcmask 261120
    %v519 = vsel %vm517, %v434, 0
    %v522 = vsel %vm517, %v435, 0
    %524 = vmatprep.subr.mxu0 0.0
    %525 = vmatpush1.msra.mxu0 0.0
    %526 = vmatprep.subr.mxu0 0.0
    %527 = vmatpush1.msra.mxu0 0.0
    %528 = vmatprep.subr.mxu0 0.0
    %529 = vmatpush1.msra.mxu0 0.0
    %530 = vmatprep.subr.mxu0 0.0
    %531 = vmatpush1.msra.mxu0 0.0
    %532 = vmatprep.subr.mxu0 0.0
    %533 = vmatpush1.msra.mxu0 0.0
    %534 = vmatprep.subr.mxu0 0.0
    %535 = vmatpush1.msra.mxu0 0.0
    %536 = vmatprep.subr.mxu0 0.0
    %537 = vmatpush1.msra.mxu0 0.0
    %538 = vmatprep.subr.mxu0 0.0
    %539 = vmatpush1.msra.mxu0 0.0
    %540 = vmatprep.subr.mxu0 0.0
    %541 = vmatpush1.msra.mxu0 0.0
    %542 = vmatprep.subr.mxu0 0.0
    %543 = vmatpush1.msra.mxu0 0.0
    %544 = vmatprep.subr.mxu0 0.0
    %545 = vmatpush1.msra.mxu0 0.0
    %546 = vmatprep.subr.mxu0 0.0
    %547 = vmatpush1.msra.mxu0 0.0
    %548 = vmatprep.subr.mxu0 0.0
    %549 = vmatpush1.msra.mxu0 %v514
    %550 = vmatprep.subr.mxu0 0.0
    %551 = vmatpush1.msra.mxu0 %v511
    %552 = vmatprep.subr.mxu0 0.0
    %553 = vmatpush1.msra.mxu0 %v506
    %554 = vmatprep.subr.mxu0 0.0
    %555 = vmatpush1.msra.mxu0 %v503
    %556 = vmatprep.subr.mxu0 0.0
    %557 = vmatpush2.msra.mxu0 0.0
    %558 = vmatprep.subr.mxu0 0.0
    %559 = vmatpush2.msra.mxu0 0.0
    %560 = vmatprep.subr.mxu0 0.0
    %561 = vmatpush2.msra.mxu0 0.0
    %562 = vmatprep.subr.mxu0 0.0
    %563 = vmatpush2.msra.mxu0 0.0
    %564 = vmatprep.subr.mxu0 0.0
    %565 = vmatpush2.msra.mxu0 0.0
    %566 = vmatprep.subr.mxu0 0.0
    %567 = vmatpush2.msra.mxu0 0.0
    %568 = vmatprep.subr.mxu0 0.0
    %569 = vmatpush2.msra.mxu0 0.0
    %570 = vmatprep.subr.mxu0 0.0
    %571 = vmatpush2.msra.mxu0 0.0
    %572 = vmatprep.subr.mxu0 0.0
    %573 = vmatpush2.msra.mxu0 0.0
    %574 = vmatprep.subr.mxu0 0.0
    %575 = vmatpush2.msra.mxu0 0.0
    %576 = vmatprep.subr.mxu0 0.0
    %577 = vmatpush2.msra.mxu0 0.0
    %578 = vmatprep.subr.mxu0 0.0
    %579 = vmatpush2.msra.mxu0 0.0
    %580 = vmatprep.subr.mxu0 0.0
    %581 = vmatpush2.msra.mxu0 0.0
    %582 = vmatprep.subr.mxu0 0.0
    %583 = vmatpush2.msra.mxu0 0.0
    %584 = vmatprep.subr.mxu0 0.0
    %585 = vmatpush2.msra.mxu0 0.0
    %586 = vmatprep.subr.mxu0 0.0
    %587 = vmatpush2.msra.mxu0 0.0
    %588 = vmatprep.mubr.f32.mxu0 0.0
    %589 = vmatmul.mubr.f32.gmra.mxu0 %v519
    %v590 = vpop.f32.mrf.mxu0
    %v591 = vadd.f32 0.0, %v590
    %v592 = vpop.f32.mrf.mxu0
    %593 = vmatprep.mubr.f32.mxu0 0.0
    %594 = vmatmul.mubr.f32.gmra.mxu0 %v522
    %v595 = vpop.f32.mrf.mxu0
    %v596 = vadd.f32 0.0, %v595
    %v597 = vpop.f32.mrf.mxu0
    %598 = vdwg.mxu0
    %v600 = vsel %vm517, %v342, 0
    %v603 = vsel %vm517, %v343, 0
    %605 = vmatprep.subr.mxu0 0.0
    %606 = vmatpush1.msra.mxu0 0.0
    %607 = vmatprep.subr.mxu0 0.0
    %608 = vmatpush1.msra.mxu0 0.0
    %609 = vmatprep.subr.mxu0 0.0
    %610 = vmatpush1.msra.mxu0 0.0
    %611 = vmatprep.subr.mxu0 0.0
    %612 = vmatpush1.msra.mxu0 0.0
    %613 = vmatprep.subr.mxu0 0.0
    %614 = vmatpush1.msra.mxu0 0.0
    %615 = vmatprep.subr.mxu0 0.0
    %616 = vmatpush1.msra.mxu0 0.0
    %617 = vmatprep.subr.mxu0 0.0
    %618 = vmatpush1.msra.mxu0 0.0
    %619 = vmatprep.subr.mxu0 0.0
    %620 = vmatpush1.msra.mxu0 0.0
    %621 = vmatprep.subr.mxu0 0.0
    %622 = vmatpush1.msra.mxu0 0.0
    %623 = vmatprep.subr.mxu0 0.0
    %624 = vmatpush1.msra.mxu0 0.0
    %625 = vmatprep.subr.mxu0 0.0
    %626 = vmatpush1.msra.mxu0 0.0
    %627 = vmatprep.subr.mxu0 0.0
    %628 = vmatpush1.msra.mxu0 0.0
    %629 = vmatprep.subr.mxu0 0.0
    %630 = vmatpush1.msra.mxu0 %v431
    %631 = vmatprep.subr.mxu0 0.0
    %632 = vmatpush1.msra.mxu0 %v428
    %633 = vmatprep.subr.mxu0 0.0
    %634 = vmatpush1.msra.mxu0 %v423
    %635 = vmatprep.subr.mxu0 0.0
    %636 = vmatpush1.msra.mxu0 %v420
    %637 = vmatprep.subr.mxu0 0.0
    %638 = vmatpush2.msra.mxu0 0.0
    %639 = vmatprep.subr.mxu0 0.0
    %640 = vmatpush2.msra.mxu0 0.0
    %641 = vmatprep.subr.mxu0 0.0
    %642 = vmatpush2.msra.mxu0 0.0
    %643 = vmatprep.subr.mxu0 0.0
    %644 = vmatpush2.msra.mxu0 0.0
    %645 = vmatprep.subr.mxu0 0.0
    %646 = vmatpush2.msra.mxu0 0.0
    %647 = vmatprep.subr.mxu0 0.0
    %648 = vmatpush2.msra.mxu0 0.0
    %649 = vmatprep.subr.mxu0 0.0
    %650 = vmatpush2.msra.mxu0 0.0
    %651 = vmatprep.subr.mxu0 0.0
    %652 = vmatpush2.msra.mxu0 0.0
    %653 = vmatprep.subr.mxu0 0.0
    %654 = vmatpush2.msra.mxu0 0.0
    %655 = vmatprep.subr.mxu0 0.0
    %656 = vmatpush2.msra.mxu0 0.0
    %657 = vmatprep.subr.mxu0 0.0
    %658 = vmatpush2.msra.mxu0 0.0
    %659 = vmatprep.subr.mxu0 0.0
    %660 = vmatpush2.msra.mxu0 0.0
    %661 = vmatprep.subr.mxu0 0.0
    %662 = vmatpush2.msra.mxu0 0.0
    %663 = vmatprep.subr.mxu0 0.0
    %664 = vmatpush2.msra.mxu0 0.0
    %665 = vmatprep.subr.mxu0 0.0
    %666 = vmatpush2.msra.mxu0 0.0
    %667 = vmatprep.subr.mxu0 0.0
    %668 = vmatpush2.msra.mxu0 0.0
    %669 = vmatprep.mubr.f32.mxu0 0.0
    %670 = vmatmul.mubr.f32.gmra.mxu0 %v600
    %v671 = vpop.f32.mrf.mxu0
    %v672 = vadd.f32 %v591, %v671
    %v673 = vpop.f32.mrf.mxu0
    %674 = vmatprep.mubr.f32.mxu0 0.0
    %675 = vmatmul.mubr.f32.gmra.mxu0 %v603
    %v676 = vpop.f32.mrf.mxu0
    %v677 = vadd.f32 %v596, %v676
    %v678 = vpop.f32.mrf.mxu0
    %679 = vdwg.mxu0
    %v680 = vld [vmem:[#allocation4] sm:$0xff]
    %v681 = vld [vmem:[#allocation4 + $0x8] sm:$0xff]
    %v682 = vld [vmem:[%s17] sm:$0xf]
    %v683 = vld [vmem:[%s17 + $0x4] sm:$0xf]
    %v684 = vld [vmem:[%s17 + $0x8] sm:$0xf]
    %v685 = vld [vmem:[%s17 + $0xc] sm:$0xf]
    %v686 = vld [vmem:[%s17 + $0x10] sm:$0xf]
    %v687 = vld [vmem:[%s17 + $0x14] sm:$0xf]
    %v688 = vld [vmem:[%s17 + $0x18] sm:$0xf]
    %v689 = vld [vmem:[%s17 + $0x1c] sm:$0xf]
    %v698 = vunpack.c.l.b16 %v682
    %v699 = vunpack.c.l.b16 %v683
    %v700 = vunpack.c.l.b16 %v684
    %v701 = vunpack.c.l.b16 %v685
    %v702 = vunpack.c.l.b16 %v686
    %v703 = vunpack.c.l.b16 %v687
    %v704 = vunpack.c.l.b16 %v688
    %v705 = vunpack.c.l.b16 %v689
    %v706 = vpack.c.b16 %v699, %v698
    %v707 = vpack.c.b16 %v701, %v700
    %v708 = vpack.c.b16 %v703, %v702
    %v709 = vpack.c.b16 %v705, %v704
    %714 = vmatprep.subr.bf16.mxu0 0
    %715 = vmatpush1.bf16.msra.mxu0 0
    %716 = vmatprep.subr.bf16.mxu0 0
    %717 = vmatpush1.bf16.msra.mxu0 0
    %718 = vmatprep.subr.bf16.mxu0 0
    %719 = vmatpush1.bf16.msra.mxu0 0
    %720 = vmatprep.subr.bf16.mxu0 0
    %721 = vmatpush1.bf16.msra.mxu0 0
    %722 = vmatprep.subr.bf16.mxu0 0
    %723 = vmatpush1.bf16.msra.mxu0 %v709
    %724 = vmatprep.subr.bf16.mxu0 0
    %725 = vmatpush1.bf16.msra.mxu0 %v708
    %726 = vmatprep.subr.bf16.mxu0 0
    %727 = vmatpush1.bf16.msra.mxu0 %v707
    %728 = vmatprep.subr.bf16.mxu0 0
    %729 = vmatpush1.bf16.msra.mxu0 %v706
    %730 = vmatprep.subr.bf16.mxu0 0
    %731 = vmatpush2.bf16.msra.mxu0 0
    %732 = vmatprep.subr.bf16.mxu0 0
    %733 = vmatpush2.bf16.msra.mxu0 0
    %734 = vmatprep.subr.bf16.mxu0 0
    %735 = vmatpush2.bf16.msra.mxu0 0
    %736 = vmatprep.subr.bf16.mxu0 0
    %737 = vmatpush2.bf16.msra.mxu0 0
    %738 = vmatprep.subr.bf16.mxu0 0
    %739 = vmatpush2.bf16.msra.mxu0 0
    %740 = vmatprep.subr.bf16.mxu0 0
    %741 = vmatpush2.bf16.msra.mxu0 0
    %742 = vmatprep.subr.bf16.mxu0 0
    %743 = vmatpush2.bf16.msra.mxu0 0
    %744 = vmatprep.subr.bf16.mxu0 0
    %745 = vmatpush2.bf16.msra.mxu0 0
    %746 = vmatprep.mubr.bf16.mxu0 0
    %747 = vmatmul.mubr.bf16.gmra.mxu0 %v380
    %v748 = vpop.f32.mrf.mxu0
    %v749 = vadd.f32 0.0, %v748
    %v750 = vpop.f32.mrf.mxu0
    %v751 = vpop.f32.mrf.mxu0
    %v752 = vadd.f32 0.0, %v751
    %v753 = vpop.f32.mrf.mxu0
    %754 = vmatprep.mubr.bf16.mxu0 0
    %755 = vmatmul.mubr.bf16.gmra.mxu0 %v383
    %v756 = vpop.f32.mrf.mxu0
    %v757 = vadd.f32 0.0, %v756
    %v758 = vpop.f32.mrf.mxu0
    %v759 = vpop.f32.mrf.mxu0
    %v760 = vadd.f32 0.0, %v759
    %v761 = vpop.f32.mrf.mxu0
    %762 = vdwg.mxu0
    %v764 = vsel %vm517, %v680, 0
    %v767 = vsel %vm517, %v681, 0
    %769 = vmatprep.subr.mxu0 0.0
    %770 = vmatpush1.msra.mxu0 0.0
    %771 = vmatprep.subr.mxu0 0.0
    %772 = vmatpush1.msra.mxu0 0.0
    %773 = vmatprep.subr.mxu0 0.0
    %774 = vmatpush1.msra.mxu0 0.0
    %775 = vmatprep.subr.mxu0 0.0
    %776 = vmatpush1.msra.mxu0 0.0
    %777 = vmatprep.subr.mxu0 0.0
    %778 = vmatpush1.msra.mxu0 0.0
    %779 = vmatprep.subr.mxu0 0.0
    %780 = vmatpush1.msra.mxu0 0.0
    %781 = vmatprep.subr.mxu0 0.0
    %782 = vmatpush1.msra.mxu0 0.0
    %783 = vmatprep.subr.mxu0 0.0
    %784 = vmatpush1.msra.mxu0 0.0
    %785 = vmatprep.subr.mxu0 0.0
    %786 = vmatpush1.msra.mxu0 0.0
    %787 = vmatprep.subr.mxu0 0.0
    %788 = vmatpush1.msra.mxu0 0.0
    %789 = vmatprep.subr.mxu0 0.0
    %790 = vmatpush1.msra.mxu0 0.0
    %791 = vmatprep.subr.mxu0 0.0
    %792 = vmatpush1.msra.mxu0 0.0
    %793 = vmatprep.subr.mxu0 0.0
    %794 = vmatpush1.msra.mxu0 %v760
    %795 = vmatprep.subr.mxu0 0.0
    %796 = vmatpush1.msra.mxu0 %v757
    %797 = vmatprep.subr.mxu0 0.0
    %798 = vmatpush1.msra.mxu0 %v752
    %799 = vmatprep.subr.mxu0 0.0
    %800 = vmatpush1.msra.mxu0 %v749
    %801 = vmatprep.subr.mxu0 0.0
    %802 = vmatpush2.msra.mxu0 0.0
    %803 = vmatprep.subr.mxu0 0.0
    %804 = vmatpush2.msra.mxu0 0.0
    %805 = vmatprep.subr.mxu0 0.0
    %806 = vmatpush2.msra.mxu0 0.0
    %807 = vmatprep.subr.mxu0 0.0
    %808 = vmatpush2.msra.mxu0 0.0
    %809 = vmatprep.subr.mxu0 0.0
    %810 = vmatpush2.msra.mxu0 0.0
    %811 = vmatprep.subr.mxu0 0.0
    %812 = vmatpush2.msra.mxu0 0.0
    %813 = vmatprep.subr.mxu0 0.0
    %814 = vmatpush2.msra.mxu0 0.0
    %815 = vmatprep.subr.mxu0 0.0
    %816 = vmatpush2.msra.mxu0 0.0
    %817 = vmatprep.subr.mxu0 0.0
    %818 = vmatpush2.msra.mxu0 0.0
    %819 = vmatprep.subr.mxu0 0.0
    %820 = vmatpush2.msra.mxu0 0.0
    %821 = vmatprep.subr.mxu0 0.0
    %822 = vmatpush2.msra.mxu0 0.0
    %823 = vmatprep.subr.mxu0 0.0
    %824 = vmatpush2.msra.mxu0 0.0
    %825 = vmatprep.subr.mxu0 0.0
    %826 = vmatpush2.msra.mxu0 0.0
    %827 = vmatprep.subr.mxu0 0.0
    %828 = vmatpush2.msra.mxu0 0.0
    %829 = vmatprep.subr.mxu0 0.0
    %830 = vmatpush2.msra.mxu0 0.0
    %831 = vmatprep.subr.mxu0 0.0
    %832 = vmatpush2.msra.mxu0 0.0
    %833 = vmatprep.mubr.f32.mxu0 0.0
    %834 = vmatmul.mubr.f32.gmra.mxu0 %v764
    %v835 = vpop.f32.mrf.mxu0
    %v836 = vadd.f32 0.0, %v835
    %v837 = vpop.f32.mrf.mxu0
    %838 = vmatprep.mubr.f32.mxu0 0.0
    %839 = vmatmul.mubr.f32.gmra.mxu0 %v767
    %v840 = vpop.f32.mrf.mxu0
    %v841 = vadd.f32 0.0, %v840
    %v842 = vpop.f32.mrf.mxu0
    %843 = vdwg.mxu0
    %v844 = vadd.f32 %v672, %v836
    %v845 = vadd.f32 %v677, %v841
    %v846 = vld [vmem:[%s21] sm:$0x1]
    %v848 = vlaneseq
    %v849 = vshrl.u32 %v848, 7
    %v850 = vsub.s32 0, %v849
    %v851 = vrot.slane %v846, %v850
    %v853 = vadd.f32 %v844, %v851
    %v854 = vadd.f32 %v845, %v851
    %v855 = vsel %vm378, %v853, 0.0
    %v856 = vsel %vm378, %v854, 0.0
    %v857 = vadd.f32 %v855, %v856
    %v858 = vrot.slane %v857, 4
    %v859 = vadd.f32 %v857, %v858
    %v860 = vrot.slane %v859, 2
    %v861 = vadd.f32 %v859, %v860
    %v862 = vrot.slane %v861, 1
    %v863 = vadd.f32 %v861, %v862
    %v864 = vrcp.pop 16.0
    %v865 = vmul.f32 %v863, %v864
    %v866 = vmul.f32 %v853, %v853
    %v867 = vmul.f32 %v854, %v854
    %v868 = vsel %vm378, %v866, 0.0
    %v869 = vsel %vm378, %v867, 0.0
    %v870 = vadd.f32 %v868, %v869
    %v871 = vrot.slane %v870, 4
    %v872 = vadd.f32 %v870, %v871
    %v873 = vrot.slane %v872, 2
    %v874 = vadd.f32 %v872, %v873
    %v875 = vrot.slane %v874, 1
    %v876 = vadd.f32 %v874, %v875
    %v877 = vmul.f32 %v876, %v864
    %v878 = vld [vmem:[%s19] sm:$0xff]
    %v879 = vld [vmem:[%s19 + $0x8] sm:$0xff]
    %v880 = vld [vmem:[%s19 + $0x10] sm:$0xff]
    %v881 = vld [vmem:[%s19 + $0x18] sm:$0xff]
    %v882 = vld [vmem:[%s19 + $0x20] sm:$0xff]
    %v883 = vld [vmem:[%s19 + $0x28] sm:$0xff]
    %v884 = vld [vmem:[%s19 + $0x30] sm:$0xff]
    %v885 = vld [vmem:[%s19 + $0x38] sm:$0xff]
    %v887 = vsel %vm378, %v865, 0
    %889 = vmatprep.subr.mxu0 0.0
    %890 = vmatpush1.msra.mxu0 0.0
    %891 = vmatprep.subr.mxu0 0.0
    %892 = vmatpush1.msra.mxu0 0.0
    %893 = vmatprep.subr.mxu0 0.0
    %894 = vmatpush1.msra.mxu0 0.0
    %895 = vmatprep.subr.mxu0 0.0
    %896 = vmatpush1.msra.mxu0 0.0
    %897 = vmatprep.subr.mxu0 0.0
    %898 = vmatpush1.msra.mxu0 0.0
    %899 = vmatprep.subr.mxu0 0.0
    %900 = vmatpush1.msra.mxu0 0.0
    %901 = vmatprep.subr.mxu0 0.0
    %902 = vmatpush1.msra.mxu0 0.0
    %903 = vmatprep.subr.mxu0 0.0
    %904 = vmatpush1.msra.mxu0 0.0
    %905 = vmatprep.subr.mxu0 0.0
    %906 = vmatpush1.msra.mxu0 %v885
    %907 = vmatprep.subr.mxu0 0.0
    %908 = vmatpush1.msra.mxu0 %v884
    %909 = vmatprep.subr.mxu0 0.0
    %910 = vmatpush1.msra.mxu0 %v883
    %911 = vmatprep.subr.mxu0 0.0
    %912 = vmatpush1.msra.mxu0 %v882
    %913 = vmatprep.subr.mxu0 0.0
    %914 = vmatpush1.msra.mxu0 %v881
    %915 = vmatprep.subr.mxu0 0.0
    %916 = vmatpush1.msra.mxu0 %v880
    %917 = vmatprep.subr.mxu0 0.0
    %918 = vmatpush1.msra.mxu0 %v879
    %919 = vmatprep.subr.mxu0 0.0
    %920 = vmatpush1.msra.mxu0 %v878
    %921 = vmatprep.subr.mxu0 0.0
    %922 = vmatpush2.msra.mxu0 0.0
    %923 = vmatprep.subr.mxu0 0.0
    %924 = vmatpush2.msra.mxu0 0.0
    %925 = vmatprep.subr.mxu0 0.0
    %926 = vmatpush2.msra.mxu0 0.0
    %927 = vmatprep.subr.mxu0 0.0
    %928 = vmatpush2.msra.mxu0 0.0
    %929 = vmatprep.subr.mxu0 0.0
    %930 = vmatpush2.msra.mxu0 0.0
    %931 = vmatprep.subr.mxu0 0.0
    %932 = vmatpush2.msra.mxu0 0.0
    %933 = vmatprep.subr.mxu0 0.0
    %934 = vmatpush2.msra.mxu0 0.0
    %935 = vmatprep.subr.mxu0 0.0
    %936 = vmatpush2.msra.mxu0 0.0
    %937 = vmatprep.subr.mxu0 0.0
    %938 = vmatpush2.msra.mxu0 0.0
    %939 = vmatprep.subr.mxu0 0.0
    %940 = vmatpush2.msra.mxu0 0.0
    %941 = vmatprep.subr.mxu0 0.0
    %942 = vmatpush2.msra.mxu0 0.0
    %943 = vmatprep.subr.mxu0 0.0
    %944 = vmatpush2.msra.mxu0 0.0
    %945 = vmatprep.subr.mxu0 0.0
    %946 = vmatpush2.msra.mxu0 0.0
    %947 = vmatprep.subr.mxu0 0.0
    %948 = vmatpush2.msra.mxu0 0.0
    %949 = vmatprep.subr.mxu0 0.0
    %950 = vmatpush2.msra.mxu0 0.0
    %951 = vmatprep.subr.mxu0 0.0
    %952 = vmatpush2.msra.mxu0 0.0
    %953 = vmatprep.mubr.f32.mxu0 0.0
    %954 = vmatmul.mubr.f32.gmra.mxu0 %v887
    %v955 = vpop.f32.mrf.mxu0
    %v956 = vadd.f32 0.0, %v955
    %v957 = vpop.f32.mrf.mxu0
    %958 = vdwg.mxu0
    %v960 = vsel %vm378, %v877, 0
    %962 = vmatprep.subr.mxu0 0.0
    %963 = vmatpush1.msra.mxu0 0.0
    %964 = vmatprep.subr.mxu0 0.0
    %965 = vmatpush1.msra.mxu0 0.0
    %966 = vmatprep.subr.mxu0 0.0
    %967 = vmatpush1.msra.mxu0 0.0
    %968 = vmatprep.subr.mxu0 0.0
    %969 = vmatpush1.msra.mxu0 0.0
    %970 = vmatprep.subr.mxu0 0.0
    %971 = vmatpush1.msra.mxu0 0.0
    %972 = vmatprep.subr.mxu0 0.0
    %973 = vmatpush1.msra.mxu0 0.0
    %974 = vmatprep.subr.mxu0 0.0
    %975 = vmatpush1.msra.mxu0 0.0
    %976 = vmatprep.subr.mxu0 0.0
    %977 = vmatpush1.msra.mxu0 0.0
    %978 = vmatprep.subr.mxu0 0.0
    %979 = vmatpush1.msra.mxu0 %v885
    %980 = vmatprep.subr.mxu0 0.0
    %981 = vmatpush1.msra.mxu0 %v884
    %982 = vmatprep.subr.mxu0 0.0
    %983 = vmatpush1.msra.mxu0 %v883
    %984 = vmatprep.subr.mxu0 0.0
    %985 = vmatpush1.msra.mxu0 %v882
    %986 = vmatprep.subr.mxu0 0.0
    %987 = vmatpush1.msra.mxu0 %v881
    %988 = vmatprep.subr.mxu0 0.0
    %989 = vmatpush1.msra.mxu0 %v880
    %990 = vmatprep.subr.mxu0 0.0
    %991 = vmatpush1.msra.mxu0 %v879
    %992 = vmatprep.subr.mxu0 0.0
    %993 = vmatpush1.msra.mxu0 %v878
    %994 = vmatprep.subr.mxu0 0.0
    %995 = vmatpush2.msra.mxu0 0.0
    %996 = vmatprep.subr.mxu0 0.0
    %997 = vmatpush2.msra.mxu0 0.0
    %998 = vmatprep.subr.mxu0 0.0
    %999 = vmatpush2.msra.mxu0 0.0
    %1000 = vmatprep.subr.mxu0 0.0
    %1001 = vmatpush2.msra.mxu0 0.0
    %1002 = vmatprep.subr.mxu0 0.0
    %1003 = vmatpush2.msra.mxu0 0.0
    %1004 = vmatprep.subr.mxu0 0.0
    %1005 = vmatpush2.msra.mxu0 0.0
    %1006 = vmatprep.subr.mxu0 0.0
    %1007 = vmatpush2.msra.mxu0 0.0
    %1008 = vmatprep.subr.mxu0 0.0
    %1009 = vmatpush2.msra.mxu0 0.0
    %1010 = vmatprep.subr.mxu0 0.0
    %1011 = vmatpush2.msra.mxu0 0.0
    %1012 = vmatprep.subr.mxu0 0.0
    %1013 = vmatpush2.msra.mxu0 0.0
    %1014 = vmatprep.subr.mxu0 0.0
    %1015 = vmatpush2.msra.mxu0 0.0
    %1016 = vmatprep.subr.mxu0 0.0
    %1017 = vmatpush2.msra.mxu0 0.0
    %1018 = vmatprep.subr.mxu0 0.0
    %1019 = vmatpush2.msra.mxu0 0.0
    %1020 = vmatprep.subr.mxu0 0.0
    %1021 = vmatpush2.msra.mxu0 0.0
    %1022 = vmatprep.subr.mxu0 0.0
    %1023 = vmatpush2.msra.mxu0 0.0
    %1024 = vmatprep.subr.mxu0 0.0
    %1025 = vmatpush2.msra.mxu0 0.0
    %1026 = vmatprep.mubr.f32.mxu0 0.0
    %1027 = vmatmul.mubr.f32.gmra.mxu0 %v960
    %v1028 = vpop.f32.mrf.mxu0
    %v1029 = vadd.f32 0.0, %v1028
    %v1030 = vpop.f32.mrf.mxu0
    %1031 = vdwg.mxu0
    %v1032 = vmul.f32 %v956, %v956
    %v1033 = vsub.f32 %v1029, %v1032
    %v1034 = vlaneseq
    %v1035 = vshrl.u32 %v1034, 7
    %v1036 = vsub.s32 0, %v1035
    %v1037 = vrot.slane %v956, %v1036
    %v1038 = vsub.f32 %v853, %v1037
    %v1039 = vsub.f32 %v854, %v1037
    %v1040 = vadd.f32 %v1033, 1e-05
    %v1041 = vrsqrt.pop %v1040
    %v1042 = vlaneseq
    %v1043 = vshrl.u32 %v1042, 7
    %v1044 = vsub.s32 0, %v1043
    %v1045 = vrot.slane %v1041, %v1044
    %v1046 = vmul.f32 %v1038, %v1045
    %v1047 = vmul.f32 %v1039, %v1045
    %v1048 = vld [vmem:[%s23] sm:$0x1]
    %v1050 = vlaneseq
    %v1051 = vshrl.u32 %v1050, 7
    %v1052 = vsub.s32 0, %v1051
    %v1053 = vrot.slane %v1048, %v1052
    %v1055 = vmul.f32 %v1046, %v1053
    %v1056 = vmul.f32 %v1047, %v1053
    %v1057 = vld [vmem:[%s25] sm:$0x1]
    %v1059 = vlaneseq
    %v1060 = vshrl.u32 %v1059, 7
    %v1061 = vsub.s32 0, %v1060
    %v1062 = vrot.slane %v1057, %v1061
    %v1064 = vadd.f32 %v1055, %v1062
    %v1065 = vadd.f32 %v1056, %v1062
    %v1066 = vmax.f32 %v1064, 0.0
    %v1067 = vmax.f32 %v1065, 0.0
    %v1068 = vld [vmem:[#allocation6] sm:$0xff]
    %v1069 = vld [vmem:[#allocation10] sm:$0xf]
    %v1070 = vld [vmem:[#allocation10 + $0x4] sm:$0xf]
    %v1071 = vld [vmem:[#allocation10 + $0x8] sm:$0xf]
    %v1072 = vld [vmem:[#allocation10 + $0xc] sm:$0xf]
    %v1073 = vld [vmem:[#allocation10 + $0x10] sm:$0xf]
    %v1074 = vld [vmem:[#allocation10 + $0x14] sm:$0xf]
    %v1075 = vld [vmem:[#allocation10 + $0x18] sm:$0xf]
    %v1076 = vld [vmem:[#allocation10 + $0x1c] sm:$0xf]
    %v1077 = vpack.c.bf16 %v1067, %v1066
    %v1086 = vunpack.c.l.b16 %v1069
    %v1087 = vunpack.c.l.b16 %v1070
    %v1088 = vunpack.c.l.b16 %v1071
    %v1089 = vunpack.c.l.b16 %v1072
    %v1090 = vunpack.c.l.b16 %v1073
    %v1091 = vunpack.c.l.b16 %v1074
    %v1092 = vunpack.c.l.b16 %v1075
    %v1093 = vunpack.c.l.b16 %v1076
    %v1094 = vpack.c.b16 %v1087, %v1086
    %v1095 = vpack.c.b16 %v1089, %v1088
    %v1096 = vpack.c.b16 %v1091, %v1090
    %v1097 = vpack.c.b16 %v1093, %v1092
    %v1103 = vsel %vm378, %v1077, 0
    %1105 = vmatprep.subr.bf16.mxu0 0
    %1106 = vmatpush1.bf16.msra.mxu0 0
    %1107 = vmatprep.subr.bf16.mxu0 0
    %1108 = vmatpush1.bf16.msra.mxu0 0
    %1109 = vmatprep.subr.bf16.mxu0 0
    %1110 = vmatpush1.bf16.msra.mxu0 0
    %1111 = vmatprep.subr.bf16.mxu0 0
    %1112 = vmatpush1.bf16.msra.mxu0 0
    %1113 = vmatprep.subr.bf16.mxu0 0
    %1114 = vmatpush1.bf16.msra.mxu0 %v1097
    %1115 = vmatprep.subr.bf16.mxu0 0
    %1116 = vmatpush1.bf16.msra.mxu0 %v1096
    %1117 = vmatprep.subr.bf16.mxu0 0
    %1118 = vmatpush1.bf16.msra.mxu0 %v1095
    %1119 = vmatprep.subr.bf16.mxu0 0
    %1120 = vmatpush1.bf16.msra.mxu0 %v1094
    %1121 = vmatprep.subr.bf16.mxu0 0
    %1122 = vmatpush2.bf16.msra.mxu0 0
    %1123 = vmatprep.subr.bf16.mxu0 0
    %1124 = vmatpush2.bf16.msra.mxu0 0
    %1125 = vmatprep.subr.bf16.mxu0 0
    %1126 = vmatpush2.bf16.msra.mxu0 0
    %1127 = vmatprep.subr.bf16.mxu0 0
    %1128 = vmatpush2.bf16.msra.mxu0 0
    %1129 = vmatprep.subr.bf16.mxu0 0
    %1130 = vmatpush2.bf16.msra.mxu0 0
    %1131 = vmatprep.subr.bf16.mxu0 0
    %1132 = vmatpush2.bf16.msra.mxu0 0
    %1133 = vmatprep.subr.bf16.mxu0 0
    %1134 = vmatpush2.bf16.msra.mxu0 0
    %1135 = vmatprep.subr.bf16.mxu0 0
    %1136 = vmatpush2.bf16.msra.mxu0 0
    %1137 = vmatprep.mubr.bf16.mxu0 0
    %1138 = vmatmul.mubr.bf16.gmra.mxu0 %v1103
    %v1139 = vpop.f32.mrf.mxu0
    %v1140 = vadd.f32 0.0, %v1139
    %v1141 = vpop.f32.mrf.mxu0
    %v1142 = vpop.f32.mrf.mxu0
    %v1143 = vadd.f32 0.0, %v1142
    %v1144 = vpop.f32.mrf.mxu0
    %1145 = vdwg.mxu0
    %v1146 = vld [vmem:[#allocation7] sm:$0xff]
    %v1147 = vld [vmem:[#allocation12] sm:$0xf]
    %v1148 = vld [vmem:[#allocation12 + $0x4] sm:$0xf]
    %v1149 = vld [vmem:[#allocation12 + $0x8] sm:$0xf]
    %v1150 = vld [vmem:[#allocation12 + $0xc] sm:$0xf]
    %v1151 = vld [vmem:[#allocation12 + $0x10] sm:$0xf]
    %v1152 = vld [vmem:[#allocation12 + $0x14] sm:$0xf]
    %v1153 = vld [vmem:[#allocation12 + $0x18] sm:$0xf]
    %v1154 = vld [vmem:[#allocation12 + $0x1c] sm:$0xf]
    %v1163 = vunpack.c.l.b16 %v1147
    %v1164 = vunpack.c.l.b16 %v1148
    %v1165 = vunpack.c.l.b16 %v1149
    %v1166 = vunpack.c.l.b16 %v1150
    %v1167 = vunpack.c.l.b16 %v1151
    %v1168 = vunpack.c.l.b16 %v1152
    %v1169 = vunpack.c.l.b16 %v1153
    %v1170 = vunpack.c.l.b16 %v1154
    %v1171 = vpack.c.b16 %v1164, %v1163
    %v1172 = vpack.c.b16 %v1166, %v1165
    %v1173 = vpack.c.b16 %v1168, %v1167
    %v1174 = vpack.c.b16 %v1170, %v1169
    %1179 = vmatprep.subr.bf16.mxu0 0
    %1180 = vmatpush1.bf16.msra.mxu0 0
    %1181 = vmatprep.subr.bf16.mxu0 0
    %1182 = vmatpush1.bf16.msra.mxu0 0
    %1183 = vmatprep.subr.bf16.mxu0 0
    %1184 = vmatpush1.bf16.msra.mxu0 0
    %1185 = vmatprep.subr.bf16.mxu0 0
    %1186 = vmatpush1.bf16.msra.mxu0 0
    %1187 = vmatprep.subr.bf16.mxu0 0
    %1188 = vmatpush1.bf16.msra.mxu0 %v1174
    %1189 = vmatprep.subr.bf16.mxu0 0
    %1190 = vmatpush1.bf16.msra.mxu0 %v1173
    %1191 = vmatprep.subr.bf16.mxu0 0
    %1192 = vmatpush1.bf16.msra.mxu0 %v1172
    %1193 = vmatprep.subr.bf16.mxu0 0
    %1194 = vmatpush1.bf16.msra.mxu0 %v1171
    %1195 = vmatprep.subr.bf16.mxu0 0
    %1196 = vmatpush2.bf16.msra.mxu0 0
    %1197 = vmatprep.subr.bf16.mxu0 0
    %1198 = vmatpush2.bf16.msra.mxu0 0
    %1199 = vmatprep.subr.bf16.mxu0 0
    %1200 = vmatpush2.bf16.msra.mxu0 0
    %1201 = vmatprep.subr.bf16.mxu0 0
    %1202 = vmatpush2.bf16.msra.mxu0 0
    %1203 = vmatprep.subr.bf16.mxu0 0
    %1204 = vmatpush2.bf16.msra.mxu0 0
    %1205 = vmatprep.subr.bf16.mxu0 0
    %1206 = vmatpush2.bf16.msra.mxu0 0
    %1207 = vmatprep.subr.bf16.mxu0 0
    %1208 = vmatpush2.bf16.msra.mxu0 0
    %1209 = vmatprep.subr.bf16.mxu0 0
    %1210 = vmatpush2.bf16.msra.mxu0 0
    %1211 = vmatprep.mubr.bf16.mxu0 0
    %1212 = vmatmul.mubr.bf16.gmra.mxu0 %v1103
    %v1213 = vpop.f32.mrf.mxu0
    %v1214 = vadd.f32 0.0, %v1213
    %v1215 = vpop.f32.mrf.mxu0
    %v1216 = vpop.f32.mrf.mxu0
    %v1217 = vadd.f32 0.0, %v1216
    %v1218 = vpop.f32.mrf.mxu0
    %1219 = vdwg.mxu0
    %vm1220 = vcmask 130048
    %v1222 = vsel %vm1220, %v1146, 0
    %1224 = vmatprep.subr.mxu0 0.0
    %1225 = vmatpush1.msra.mxu0 0.0
    %1226 = vmatprep.subr.mxu0 0.0
    %1227 = vmatpush1.msra.mxu0 0.0
    %1228 = vmatprep.subr.mxu0 0.0
    %1229 = vmatpush1.msra.mxu0 0.0
    %1230 = vmatprep.subr.mxu0 0.0
    %1231 = vmatpush1.msra.mxu0 0.0
    %1232 = vmatprep.subr.mxu0 0.0
    %1233 = vmatpush1.msra.mxu0 0.0
    %1234 = vmatprep.subr.mxu0 0.0
    %1235 = vmatpush1.msra.mxu0 0.0
    %1236 = vmatprep.subr.mxu0 0.0
    %1237 = vmatpush1.msra.mxu0 0.0
    %1238 = vmatprep.subr.mxu0 0.0
    %1239 = vmatpush1.msra.mxu0 0.0
    %1240 = vmatprep.subr.mxu0 0.0
    %1241 = vmatpush1.msra.mxu0 0.0
    %1242 = vmatprep.subr.mxu0 0.0
    %1243 = vmatpush1.msra.mxu0 0.0
    %1244 = vmatprep.subr.mxu0 0.0
    %1245 = vmatpush1.msra.mxu0 0.0
    %1246 = vmatprep.subr.mxu0 0.0
    %1247 = vmatpush1.msra.mxu0 0.0
    %1248 = vmatprep.subr.mxu0 0.0
    %1249 = vmatpush1.msra.mxu0 0.0
    %1250 = vmatprep.subr.mxu0 0.0
    %1251 = vmatpush1.msra.mxu0 0.0
    %1252 = vmatprep.subr.mxu0 0.0
    %1253 = vmatpush1.msra.mxu0 %v1217
    %1254 = vmatprep.subr.mxu0 0.0
    %1255 = vmatpush1.msra.mxu0 %v1214
    %1256 = vmatprep.subr.mxu0 0.0
    %1257 = vmatpush2.msra.mxu0 0.0
    %1258 = vmatprep.subr.mxu0 0.0
    %1259 = vmatpush2.msra.mxu0 0.0
    %1260 = vmatprep.subr.mxu0 0.0
    %1261 = vmatpush2.msra.mxu0 0.0
    %1262 = vmatprep.subr.mxu0 0.0
    %1263 = vmatpush2.msra.mxu0 0.0
    %1264 = vmatprep.subr.mxu0 0.0
    %1265 = vmatpush2.msra.mxu0 0.0
    %1266 = vmatprep.subr.mxu0 0.0
    %1267 = vmatpush2.msra.mxu0 0.0
    %1268 = vmatprep.subr.mxu0 0.0
    %1269 = vmatpush2.msra.mxu0 0.0
    %1270 = vmatprep.subr.mxu0 0.0
    %1271 = vmatpush2.msra.mxu0 0.0
    %1272 = vmatprep.subr.mxu0 0.0
    %1273 = vmatpush2.msra.mxu0 0.0
    %1274 = vmatprep.subr.mxu0 0.0
    %1275 = vmatpush2.msra.mxu0 0.0
    %1276 = vmatprep.subr.mxu0 0.0
    %1277 = vmatpush2.msra.mxu0 0.0
    %1278 = vmatprep.subr.mxu0 0.0
    %1279 = vmatpush2.msra.mxu0 0.0
    %1280 = vmatprep.subr.mxu0 0.0
    %1281 = vmatpush2.msra.mxu0 0.0
    %1282 = vmatprep.subr.mxu0 0.0
    %1283 = vmatpush2.msra.mxu0 0.0
    %1284 = vmatprep.subr.mxu0 0.0
    %1285 = vmatpush2.msra.mxu0 0.0
    %1286 = vmatprep.subr.mxu0 0.0
    %1287 = vmatpush2.msra.mxu0 0.0
    %1288 = vmatprep.mubr.f32.mxu0 0.0
    %1289 = vmatmul.mubr.f32.gmra.mxu0 %v1222
    %v1290 = vpop.f32.mrf.mxu0
    %v1291 = vadd.f32 0.0, %v1290
    %v1292 = vpop.f32.mrf.mxu0
    %1293 = vdwg.mxu0
    %v1295 = vsel %vm1220, %v1068, 0
    %1297 = vmatprep.subr.mxu0 0.0
    %1298 = vmatpush1.msra.mxu0 0.0
    %1299 = vmatprep.subr.mxu0 0.0
    %1300 = vmatpush1.msra.mxu0 0.0
    %1301 = vmatprep.subr.mxu0 0.0
    %1302 = vmatpush1.msra.mxu0 0.0
    %1303 = vmatprep.subr.mxu0 0.0
    %1304 = vmatpush1.msra.mxu0 0.0
    %1305 = vmatprep.subr.mxu0 0.0
    %1306 = vmatpush1.msra.mxu0 0.0
    %1307 = vmatprep.subr.mxu0 0.0
    %1308 = vmatpush1.msra.mxu0 0.0
    %1309 = vmatprep.subr.mxu0 0.0
    %1310 = vmatpush1.msra.mxu0 0.0
    %1311 = vmatprep.subr.mxu0 0.0
    %1312 = vmatpush1.msra.mxu0 0.0
    %1313 = vmatprep.subr.mxu0 0.0
    %1314 = vmatpush1.msra.mxu0 0.0
    %1315 = vmatprep.subr.mxu0 0.0
    %1316 = vmatpush1.msra.mxu0 0.0
    %1317 = vmatprep.subr.mxu0 0.0
    %1318 = vmatpush1.msra.mxu0 0.0
    %1319 = vmatprep.subr.mxu0 0.0
    %1320 = vmatpush1.msra.mxu0 0.0
    %1321 = vmatprep.subr.mxu0 0.0
    %1322 = vmatpush1.msra.mxu0 0.0
    %1323 = vmatprep.subr.mxu0 0.0
    %1324 = vmatpush1.msra.mxu0 0.0
    %1325 = vmatprep.subr.mxu0 0.0
    %1326 = vmatpush1.msra.mxu0 %v1143
    %1327 = vmatprep.subr.mxu0 0.0
    %1328 = vmatpush1.msra.mxu0 %v1140
    %1329 = vmatprep.subr.mxu0 0.0
    %1330 = vmatpush2.msra.mxu0 0.0
    %1331 = vmatprep.subr.mxu0 0.0
    %1332 = vmatpush2.msra.mxu0 0.0
    %1333 = vmatprep.subr.mxu0 0.0
    %1334 = vmatpush2.msra.mxu0 0.0
    %1335 = vmatprep.subr.mxu0 0.0
    %1336 = vmatpush2.msra.mxu0 0.0
    %1337 = vmatprep.subr.mxu0 0.0
    %1338 = vmatpush2.msra.mxu0 0.0
    %1339 = vmatprep.subr.mxu0 0.0
    %1340 = vmatpush2.msra.mxu0 0.0
    %1341 = vmatprep.subr.mxu0 0.0
    %1342 = vmatpush2.msra.mxu0 0.0
    %1343 = vmatprep.subr.mxu0 0.0
    %1344 = vmatpush2.msra.mxu0 0.0
    %1345 = vmatprep.subr.mxu0 0.0
    %1346 = vmatpush2.msra.mxu0 0.0
    %1347 = vmatprep.subr.mxu0 0.0
    %1348 = vmatpush2.msra.mxu0 0.0
    %1349 = vmatprep.subr.mxu0 0.0
    %1350 = vmatpush2.msra.mxu0 0.0
    %1351 = vmatprep.subr.mxu0 0.0
    %1352 = vmatpush2.msra.mxu0 0.0
    %1353 = vmatprep.subr.mxu0 0.0
    %1354 = vmatpush2.msra.mxu0 0.0
    %1355 = vmatprep.subr.mxu0 0.0
    %1356 = vmatpush2.msra.mxu0 0.0
    %1357 = vmatprep.subr.mxu0 0.0
    %1358 = vmatpush2.msra.mxu0 0.0
    %1359 = vmatprep.subr.mxu0 0.0
    %1360 = vmatpush2.msra.mxu0 0.0
    %1361 = vmatprep.mubr.f32.mxu0 0.0
    %1362 = vmatmul.mubr.f32.gmra.mxu0 %v1295
    %v1363 = vpop.f32.mrf.mxu0
    %v1364 = vadd.f32 %v1291, %v1363
    %v1365 = vpop.f32.mrf.mxu0
    %1366 = vdwg.mxu0
    %v1367 = vld [vmem:[#allocation9] sm:$0xff]
    %v1368 = vld [vmem:[#allocation13] sm:$0xf]
    %v1369 = vld [vmem:[#allocation13 + $0x4] sm:$0xf]
    %v1370 = vld [vmem:[#allocation13 + $0x8] sm:$0xf]
    %v1371 = vld [vmem:[#allocation13 + $0xc] sm:$0xf]
    %v1372 = vld [vmem:[#allocation13 + $0x10] sm:$0xf]
    %v1373 = vld [vmem:[#allocation13 + $0x14] sm:$0xf]
    %v1374 = vld [vmem:[#allocation13 + $0x18] sm:$0xf]
    %v1375 = vld [vmem:[#allocation13 + $0x1c] sm:$0xf]
    %v1384 = vunpack.c.l.b16 %v1368
    %v1385 = vunpack.c.l.b16 %v1369
    %v1386 = vunpack.c.l.b16 %v1370
    %v1387 = vunpack.c.l.b16 %v1371
    %v1388 = vunpack.c.l.b16 %v1372
    %v1389 = vunpack.c.l.b16 %v1373
    %v1390 = vunpack.c.l.b16 %v1374
    %v1391 = vunpack.c.l.b16 %v1375
    %v1392 = vpack.c.b16 %v1385, %v1384
    %v1393 = vpack.c.b16 %v1387, %v1386
    %v1394 = vpack.c.b16 %v1389, %v1388
    %v1395 = vpack.c.b16 %v1391, %v1390
    %1400 = vmatprep.subr.bf16.mxu0 0
    %1401 = vmatpush1.bf16.msra.mxu0 0
    %1402 = vmatprep.subr.bf16.mxu0 0
    %1403 = vmatpush1.bf16.msra.mxu0 0
    %1404 = vmatprep.subr.bf16.mxu0 0
    %1405 = vmatpush1.bf16.msra.mxu0 0
    %1406 = vmatprep.subr.bf16.mxu0 0
    %1407 = vmatpush1.bf16.msra.mxu0 0
    %1408 = vmatprep.subr.bf16.mxu0 0
    %1409 = vmatpush1.bf16.msra.mxu0 %v1395
    %1410 = vmatprep.subr.bf16.mxu0 0
    %1411 = vmatpush1.bf16.msra.mxu0 %v1394
    %1412 = vmatprep.subr.bf16.mxu0 0
    %1413 = vmatpush1.bf16.msra.mxu0 %v1393
    %1414 = vmatprep.subr.bf16.mxu0 0
    %1415 = vmatpush1.bf16.msra.mxu0 %v1392
    %1416 = vmatprep.subr.bf16.mxu0 0
    %1417 = vmatpush2.bf16.msra.mxu0 0
    %1418 = vmatprep.subr.bf16.mxu0 0
    %1419 = vmatpush2.bf16.msra.mxu0 0
    %1420 = vmatprep.subr.bf16.mxu0 0
    %1421 = vmatpush2.bf16.msra.mxu0 0
    %1422 = vmatprep.subr.bf16.mxu0 0
    %1423 = vmatpush2.bf16.msra.mxu0 0
    %1424 = vmatprep.subr.bf16.mxu0 0
    %1425 = vmatpush2.bf16.msra.mxu0 0
    %1426 = vmatprep.subr.bf16.mxu0 0
    %1427 = vmatpush2.bf16.msra.mxu0 0
    %1428 = vmatprep.subr.bf16.mxu0 0
    %1429 = vmatpush2.bf16.msra.mxu0 0
    %1430 = vmatprep.subr.bf16.mxu0 0
    %1431 = vmatpush2.bf16.msra.mxu0 0
    %1432 = vmatprep.mubr.bf16.mxu0 0
    %1433 = vmatmul.mubr.bf16.gmra.mxu0 %v1103
    %v1434 = vpop.f32.mrf.mxu0
    %v1435 = vadd.f32 0.0, %v1434
    %v1436 = vpop.f32.mrf.mxu0
    %v1437 = vpop.f32.mrf.mxu0
    %v1438 = vadd.f32 0.0, %v1437
    %v1439 = vpop.f32.mrf.mxu0
    %1440 = vdwg.mxu0
    %v1442 = vsel %vm1220, %v1367, 0
    %1444 = vmatprep.subr.mxu0 0.0
    %1445 = vmatpush1.msra.mxu0 0.0
    %1446 = vmatprep.subr.mxu0 0.0
    %1447 = vmatpush1.msra.mxu0 0.0
    %1448 = vmatprep.subr.mxu0 0.0
    %1449 = vmatpush1.msra.mxu0 0.0
    %1450 = vmatprep.subr.mxu0 0.0
    %1451 = vmatpush1.msra.mxu0 0.0
    %1452 = vmatprep.subr.mxu0 0.0
    %1453 = vmatpush1.msra.mxu0 0.0
    %1454 = vmatprep.subr.mxu0 0.0
    %1455 = vmatpush1.msra.mxu0 0.0
    %1456 = vmatprep.subr.mxu0 0.0
    %1457 = vmatpush1.msra.mxu0 0.0
    %1458 = vmatprep.subr.mxu0 0.0
    %1459 = vmatpush1.msra.mxu0 0.0
    %1460 = vmatprep.subr.mxu0 0.0
    %1461 = vmatpush1.msra.mxu0 0.0
    %1462 = vmatprep.subr.mxu0 0.0
    %1463 = vmatpush1.msra.mxu0 0.0
    %1464 = vmatprep.subr.mxu0 0.0
    %1465 = vmatpush1.msra.mxu0 0.0
    %1466 = vmatprep.subr.mxu0 0.0
    %1467 = vmatpush1.msra.mxu0 0.0
    %1468 = vmatprep.subr.mxu0 0.0
    %1469 = vmatpush1.msra.mxu0 0.0
    %1470 = vmatprep.subr.mxu0 0.0
    %1471 = vmatpush1.msra.mxu0 0.0
    %1472 = vmatprep.subr.mxu0 0.0
    %1473 = vmatpush1.msra.mxu0 %v1438
    %1474 = vmatprep.subr.mxu0 0.0
    %1475 = vmatpush1.msra.mxu0 %v1435
    %1476 = vmatprep.subr.mxu0 0.0
    %1477 = vmatpush2.msra.mxu0 0.0
    %1478 = vmatprep.subr.mxu0 0.0
    %1479 = vmatpush2.msra.mxu0 0.0
    %1480 = vmatprep.subr.mxu0 0.0
    %1481 = vmatpush2.msra.mxu0 0.0
    %1482 = vmatprep.subr.mxu0 0.0
    %1483 = vmatpush2.msra.mxu0 0.0
    %1484 = vmatprep.subr.mxu0 0.0
    %1485 = vmatpush2.msra.mxu0 0.0
    %1486 = vmatprep.subr.mxu0 0.0
    %1487 = vmatpush2.msra.mxu0 0.0
    %1488 = vmatprep.subr.mxu0 0.0
    %1489 = vmatpush2.msra.mxu0 0.0
    %1490 = vmatprep.subr.mxu0 0.0
    %1491 = vmatpush2.msra.mxu0 0.0
    %1492 = vmatprep.subr.mxu0 0.0
    %1493 = vmatpush2.msra.mxu0 0.0
    %1494 = vmatprep.subr.mxu0 0.0
    %1495 = vmatpush2.msra.mxu0 0.0
    %1496 = vmatprep.subr.mxu0 0.0
    %1497 = vmatpush2.msra.mxu0 0.0
    %1498 = vmatprep.subr.mxu0 0.0
    %1499 = vmatpush2.msra.mxu0 0.0
    %1500 = vmatprep.subr.mxu0 0.0
    %1501 = vmatpush2.msra.mxu0 0.0
    %1502 = vmatprep.subr.mxu0 0.0
    %1503 = vmatpush2.msra.mxu0 0.0
    %1504 = vmatprep.subr.mxu0 0.0
    %1505 = vmatpush2.msra.mxu0 0.0
    %1506 = vmatprep.subr.mxu0 0.0
    %1507 = vmatpush2.msra.mxu0 0.0
    %1508 = vmatprep.mubr.f32.mxu0 0.0
    %1509 = vmatmul.mubr.f32.gmra.mxu0 %v1442
    %v1510 = vpop.f32.mrf.mxu0
    %v1511 = vadd.f32 0.0, %v1510
    %v1512 = vpop.f32.mrf.mxu0
    %1513 = vdwg.mxu0
    %v1514 = vadd.f32 %v1364, %v1511
    %v1515 = vld [vmem:[%s41] sm:$0x1]
    %v1517 = vlaneseq
    %v1518 = vshrl.u32 %v1517, 7
    %v1519 = vsub.s32 0, %v1518
    %v1520 = vrot.slane %v1515, %v1519
    %v1522 = vadd.f32 %v1514, %v1520
    %v1523 = vsel %vm378, %v1522, 0.0
    %v1524 = vrot.slane %v1523, 4
    %v1525 = vadd.f32 %v1523, %v1524
    %v1526 = vrot.slane %v1525, 2
    %v1527 = vadd.f32 %v1525, %v1526
    %v1528 = vrot.slane %v1527, 1
    %v1529 = vadd.f32 %v1527, %v1528
    %v1530 = vrcp.pop 8.0
    %v1531 = vmul.f32 %v1529, %v1530
    %v1532 = vmul.f32 %v1522, %v1522
    %v1533 = vsel %vm378, %v1532, 0.0
    %v1534 = vrot.slane %v1533, 4
    %v1535 = vadd.f32 %v1533, %v1534
    %v1536 = vrot.slane %v1535, 2
    %v1537 = vadd.f32 %v1535, %v1536
    %v1538 = vrot.slane %v1537, 1
    %v1539 = vadd.f32 %v1537, %v1538
    %v1540 = vmul.f32 %v1539, %v1530
    %v1541 = vld [vmem:[%s39] sm:$0xff]
    %v1542 = vld [vmem:[%s39 + $0x8] sm:$0xff]
    %v1543 = vld [vmem:[%s39 + $0x10] sm:$0xff]
    %v1544 = vld [vmem:[%s39 + $0x18] sm:$0xff]
    %v1545 = vld [vmem:[%s39 + $0x20] sm:$0xff]
    %v1546 = vld [vmem:[%s39 + $0x28] sm:$0xff]
    %v1547 = vld [vmem:[%s39 + $0x30] sm:$0xff]
    %v1548 = vld [vmem:[%s39 + $0x38] sm:$0xff]
    %v1550 = vsel %vm378, %v1531, 0
    %1552 = vmatprep.subr.mxu0 0.0
    %1553 = vmatpush1.msra.mxu0 0.0
    %1554 = vmatprep.subr.mxu0 0.0
    %1555 = vmatpush1.msra.mxu0 0.0
    %1556 = vmatprep.subr.mxu0 0.0
    %1557 = vmatpush1.msra.mxu0 0.0
    %1558 = vmatprep.subr.mxu0 0.0
    %1559 = vmatpush1.msra.mxu0 0.0
    %1560 = vmatprep.subr.mxu0 0.0
    %1561 = vmatpush1.msra.mxu0 0.0
    %1562 = vmatprep.subr.mxu0 0.0
    %1563 = vmatpush1.msra.mxu0 0.0
    %1564 = vmatprep.subr.mxu0 0.0
    %1565 = vmatpush1.msra.mxu0 0.0
    %1566 = vmatprep.subr.mxu0 0.0
    %1567 = vmatpush1.msra.mxu0 0.0
    %1568 = vmatprep.subr.mxu0 0.0
    %1569 = vmatpush1.msra.mxu0 %v1548
    %1570 = vmatprep.subr.mxu0 0.0
    %1571 = vmatpush1.msra.mxu0 %v1547
    %1572 = vmatprep.subr.mxu0 0.0
    %1573 = vmatpush1.msra.mxu0 %v1546
    %1574 = vmatprep.subr.mxu0 0.0
    %1575 = vmatpush1.msra.mxu0 %v1545
    %1576 = vmatprep.subr.mxu0 0.0
    %1577 = vmatpush1.msra.mxu0 %v1544
    %1578 = vmatprep.subr.mxu0 0.0
    %1579 = vmatpush1.msra.mxu0 %v1543
    %1580 = vmatprep.subr.mxu0 0.0
    %1581 = vmatpush1.msra.mxu0 %v1542
    %1582 = vmatprep.subr.mxu0 0.0
    %1583 = vmatpush1.msra.mxu0 %v1541
    %1584 = vmatprep.subr.mxu0 0.0
    %1585 = vmatpush2.msra.mxu0 0.0
    %1586 = vmatprep.subr.mxu0 0.0
    %1587 = vmatpush2.msra.mxu0 0.0
    %1588 = vmatprep.subr.mxu0 0.0
    %1589 = vmatpush2.msra.mxu0 0.0
    %1590 = vmatprep.subr.mxu0 0.0
    %1591 = vmatpush2.msra.mxu0 0.0
    %1592 = vmatprep.subr.mxu0 0.0
    %1593 = vmatpush2.msra.mxu0 0.0
    %1594 = vmatprep.subr.mxu0 0.0
    %1595 = vmatpush2.msra.mxu0 0.0
    %1596 = vmatprep.subr.mxu0 0.0
    %1597 = vmatpush2.msra.mxu0 0.0
    %1598 = vmatprep.subr.mxu0 0.0
    %1599 = vmatpush2.msra.mxu0 0.0
    %1600 = vmatprep.subr.mxu0 0.0
    %1601 = vmatpush2.msra.mxu0 0.0
    %1602 = vmatprep.subr.mxu0 0.0
    %1603 = vmatpush2.msra.mxu0 0.0
    %1604 = vmatprep.subr.mxu0 0.0
    %1605 = vmatpush2.msra.mxu0 0.0
    %1606 = vmatprep.subr.mxu0 0.0
    %1607 = vmatpush2.msra.mxu0 0.0
    %1608 = vmatprep.subr.mxu0 0.0
    %1609 = vmatpush2.msra.mxu0 0.0
    %1610 = vmatprep.subr.mxu0 0.0
    %1611 = vmatpush2.msra.mxu0 0.0
    %1612 = vmatprep.subr.mxu0 0.0
    %1613 = vmatpush2.msra.mxu0 0.0
    %1614 = vmatprep.subr.mxu0 0.0
    %1615 = vmatpush2.msra.mxu0 0.0
    %1616 = vmatprep.mubr.f32.mxu0 0.0
    %1617 = vmatmul.mubr.f32.gmra.mxu0 %v1550
    %v1618 = vpop.f32.mrf.mxu0
    %v1619 = vadd.f32 0.0, %v1618
    %v1620 = vpop.f32.mrf.mxu0
    %1621 = vdwg.mxu0
    %v1623 = vsel %vm378, %v1540, 0
    %1625 = vmatprep.subr.mxu0 0.0
    %1626 = vmatpush1.msra.mxu0 0.0
    %1627 = vmatprep.subr.mxu0 0.0
    %1628 = vmatpush1.msra.mxu0 0.0
    %1629 = vmatprep.subr.mxu0 0.0
    %1630 = vmatpush1.msra.mxu0 0.0
    %1631 = vmatprep.subr.mxu0 0.0
    %1632 = vmatpush1.msra.mxu0 0.0
    %1633 = vmatprep.subr.mxu0 0.0
    %1634 = vmatpush1.msra.mxu0 0.0
    %1635 = vmatprep.subr.mxu0 0.0
    %1636 = vmatpush1.msra.mxu0 0.0
    %1637 = vmatprep.subr.mxu0 0.0
    %1638 = vmatpush1.msra.mxu0 0.0
    %1639 = vmatprep.subr.mxu0 0.0
    %1640 = vmatpush1.msra.mxu0 0.0
    %1641 = vmatprep.subr.mxu0 0.0
    %1642 = vmatpush1.msra.mxu0 %v1548
    %1643 = vmatprep.subr.mxu0 0.0
    %1644 = vmatpush1.msra.mxu0 %v1547
    %1645 = vmatprep.subr.mxu0 0.0
    %1646 = vmatpush1.msra.mxu0 %v1546
    %1647 = vmatprep.subr.mxu0 0.0
    %1648 = vmatpush1.msra.mxu0 %v1545
    %1649 = vmatprep.subr.mxu0 0.0
    %1650 = vmatpush1.msra.mxu0 %v1544
    %1651 = vmatprep.subr.mxu0 0.0
    %1652 = vmatpush1.msra.mxu0 %v1543
    %1653 = vmatprep.subr.mxu0 0.0
    %1654 = vmatpush1.msra.mxu0 %v1542
    %1655 = vmatprep.subr.mxu0 0.0
    %1656 = vmatpush1.msra.mxu0 %v1541
    %1657 = vmatprep.subr.mxu0 0.0
    %1658 = vmatpush2.msra.mxu0 0.0
    %1659 = vmatprep.subr.mxu0 0.0
    %1660 = vmatpush2.msra.mxu0 0.0
    %1661 = vmatprep.subr.mxu0 0.0
    %1662 = vmatpush2.msra.mxu0 0.0
    %1663 = vmatprep.subr.mxu0 0.0
    %1664 = vmatpush2.msra.mxu0 0.0
    %1665 = vmatprep.subr.mxu0 0.0
    %1666 = vmatpush2.msra.mxu0 0.0
    %1667 = vmatprep.subr.mxu0 0.0
    %1668 = vmatpush2.msra.mxu0 0.0
    %1669 = vmatprep.subr.mxu0 0.0
    %1670 = vmatpush2.msra.mxu0 0.0
    %1671 = vmatprep.subr.mxu0 0.0
    %1672 = vmatpush2.msra.mxu0 0.0
    %1673 = vmatprep.subr.mxu0 0.0
    %1674 = vmatpush2.msra.mxu0 0.0
    %1675 = vmatprep.subr.mxu0 0.0
    %1676 = vmatpush2.msra.mxu0 0.0
    %1677 = vmatprep.subr.mxu0 0.0
    %1678 = vmatpush2.msra.mxu0 0.0
    %1679 = vmatprep.subr.mxu0 0.0
    %1680 = vmatpush2.msra.mxu0 0.0
    %1681 = vmatprep.subr.mxu0 0.0
    %1682 = vmatpush2.msra.mxu0 0.0
    %1683 = vmatprep.subr.mxu0 0.0
    %1684 = vmatpush2.msra.mxu0 0.0
    %1685 = vmatprep.subr.mxu0 0.0
    %1686 = vmatpush2.msra.mxu0 0.0
    %1687 = vmatprep.subr.mxu0 0.0
    %1688 = vmatpush2.msra.mxu0 0.0
    %1689 = vmatprep.mubr.f32.mxu0 0.0
    %1690 = vmatmul.mubr.f32.gmra.mxu0 %v1623
    %v1691 = vpop.f32.mrf.mxu0
    %v1692 = vadd.f32 0.0, %v1691
    %v1693 = vpop.f32.mrf.mxu0
    %1694 = vdwg.mxu0
    %v1695 = vmul.f32 %v1619, %v1619
    %v1696 = vsub.f32 %v1692, %v1695
    %v1697 = vlaneseq
    %v1698 = vshrl.u32 %v1697, 7
    %v1699 = vsub.s32 0, %v1698
    %v1700 = vrot.slane %v1619, %v1699
    %v1701 = vsub.f32 %v1522, %v1700
    %v1702 = vadd.f32 %v1696, 1e-05
    %v1703 = vrsqrt.pop %v1702
    %v1704 = vlaneseq
    %v1705 = vshrl.u32 %v1704, 7
    %v1706 = vsub.s32 0, %v1705
    %v1707 = vrot.slane %v1703, %v1706
    %v1708 = vmul.f32 %v1701, %v1707
    %v1709 = vld [vmem:[%s43] sm:$0x1]
    %v1711 = vlaneseq
    %v1712 = vshrl.u32 %v1711, 7
    %v1713 = vsub.s32 0, %v1712
    %v1714 = vrot.slane %v1709, %v1713
    %v1716 = vmul.f32 %v1708, %v1714
    %v1717 = vld [vmem:[%s45] sm:$0x1]
    %v1719 = vlaneseq
    %v1720 = vshrl.u32 %v1719, 7
    %v1721 = vsub.s32 0, %v1720
    %v1722 = vrot.slane %v1717, %v1721
    %v1724 = vadd.f32 %v1716, %v1722
    %v1725 = vmax.f32 %v1724, 0.0
    %v1726 = vld [vmem:[#allocation15] sm:$0xff]
    %vm1727 = vcmask 64512
    %v1729 = vsel %vm1727, %v1726, 0
    %1731 = vmatprep.subr.mxu0 0.0
    %1732 = vmatpush1.msra.mxu0 0.0
    %1733 = vmatprep.subr.mxu0 0.0
    %1734 = vmatpush1.msra.mxu0 0.0
    %1735 = vmatprep.subr.mxu0 0.0
    %1736 = vmatpush1.msra.mxu0 0.0
    %1737 = vmatprep.subr.mxu0 0.0
    %1738 = vmatpush1.msra.mxu0 0.0
    %1739 = vmatprep.subr.mxu0 0.0
    %1740 = vmatpush1.msra.mxu0 0.0
    %1741 = vmatprep.subr.mxu0 0.0
    %1742 = vmatpush1.msra.mxu0 0.0
    %1743 = vmatprep.subr.mxu0 0.0
    %1744 = vmatpush1.msra.mxu0 0.0
    %1745 = vmatprep.subr.mxu0 0.0
    %1746 = vmatpush1.msra.mxu0 0.0
    %1747 = vmatprep.subr.mxu0 0.0
    %1748 = vmatpush1.msra.mxu0 0.0
    %1749 = vmatprep.subr.mxu0 0.0
    %1750 = vmatpush1.msra.mxu0 0.0
    %1751 = vmatprep.subr.mxu0 0.0
    %1752 = vmatpush1.msra.mxu0 0.0
    %1753 = vmatprep.subr.mxu0 0.0
    %1754 = vmatpush1.msra.mxu0 0.0
    %1755 = vmatprep.subr.mxu0 0.0
    %1756 = vmatpush1.msra.mxu0 0.0
    %1757 = vmatprep.subr.mxu0 0.0
    %1758 = vmatpush1.msra.mxu0 0.0
    %1759 = vmatprep.subr.mxu0 0.0
    %1760 = vmatpush1.msra.mxu0 0.0
    %1761 = vmatprep.subr.mxu0 0.0
    %1762 = vmatpush1.msra.mxu0 %v1725
    %1763 = vmatprep.subr.mxu0 0.0
    %1764 = vmatpush2.msra.mxu0 0.0
    %1765 = vmatprep.subr.mxu0 0.0
    %1766 = vmatpush2.msra.mxu0 0.0
    %1767 = vmatprep.subr.mxu0 0.0
    %1768 = vmatpush2.msra.mxu0 0.0
    %1769 = vmatprep.subr.mxu0 0.0
    %1770 = vmatpush2.msra.mxu0 0.0
    %1771 = vmatprep.subr.mxu0 0.0
    %1772 = vmatpush2.msra.mxu0 0.0
    %1773 = vmatprep.subr.mxu0 0.0
    %1774 = vmatpush2.msra.mxu0 0.0
    %1775 = vmatprep.subr.mxu0 0.0
    %1776 = vmatpush2.msra.mxu0 0.0
    %1777 = vmatprep.subr.mxu0 0.0
    %1778 = vmatpush2.msra.mxu0 0.0
    %1779 = vmatprep.subr.mxu0 0.0
    %1780 = vmatpush2.msra.mxu0 0.0
    %1781 = vmatprep.subr.mxu0 0.0
    %1782 = vmatpush2.msra.mxu0 0.0
    %1783 = vmatprep.subr.mxu0 0.0
    %1784 = vmatpush2.msra.mxu0 0.0
    %1785 = vmatprep.subr.mxu0 0.0
    %1786 = vmatpush2.msra.mxu0 0.0
    %1787 = vmatprep.subr.mxu0 0.0
    %1788 = vmatpush2.msra.mxu0 0.0
    %1789 = vmatprep.subr.mxu0 0.0
    %1790 = vmatpush2.msra.mxu0 0.0
    %1791 = vmatprep.subr.mxu0 0.0
    %1792 = vmatpush2.msra.mxu0 0.0
    %1793 = vmatprep.subr.mxu0 0.0
    %1794 = vmatpush2.msra.mxu0 0.0
    %1795 = vmatprep.mubr.f32.mxu0 0.0
    %1796 = vmatmul.mubr.f32.gmra.mxu0 %v1729
    %v1797 = vpop.f32.mrf.mxu0
    %v1798 = vadd.f32 0.0, %v1797
    %v1799 = vpop.f32.mrf.mxu0
    %1800 = vdwg.mxu0
    %v1802 = vrot.slane %v1798, 2
    %1803 = vrot.lane.b32.xlu0 %v1802, 64
    %v1804 = vpop.permute.xlu0 %1803
    %v1806 = vrot.slane %v1798, 4
    %v1808 = vrot.slane %v1798, 6
    %1809 = vrot.lane.b32.xlu0 %v1808, 64
    %v1810 = vpop.permute.xlu0 %1809
    %v1812 = vsel %vm378, %v1798, %v1804
    %v1813 = vsel %vm378, %v1806, %v1810
    %v1814 = vld [vmem:[%s49] sm:$0xf]
    %v1815 = vld [vmem:[%s49 + $0x4] sm:$0xf]
    %v1816 = vld [vmem:[%s49 + $0x8] sm:$0xf]
    %v1817 = vld [vmem:[%s49 + $0xc] sm:$0xf]
    %v1818 = vld [vmem:[%s49 + $0x10] sm:$0xf]
    %v1819 = vld [vmem:[%s49 + $0x14] sm:$0xf]
    %v1820 = vld [vmem:[%s49 + $0x18] sm:$0xf]
    %v1821 = vld [vmem:[%s49 + $0x1c] sm:$0xf]
    %v1822 = vld [vmem:[%s49 + $0x20] sm:$0xf]
    %v1823 = vld [vmem:[%s49 + $0x24] sm:$0xf]
    %v1824 = vld [vmem:[%s49 + $0x28] sm:$0xf]
    %v1825 = vld [vmem:[%s49 + $0x2c] sm:$0xf]
    %v1826 = vld [vmem:[%s49 + $0x30] sm:$0xf]
    %v1827 = vld [vmem:[%s49 + $0x34] sm:$0xf]
    %v1828 = vld [vmem:[%s49 + $0x38] sm:$0xf]
    %v1829 = vld [vmem:[%s49 + $0x3c] sm:$0xf]
    %v1830 = vld [vmem:[%s49 + $0x40] sm:$0xf]
    %v1831 = vld [vmem:[%s49 + $0x44] sm:$0xf]
    %v1832 = vld [vmem:[%s49 + $0x48] sm:$0xf]
    %v1833 = vld [vmem:[%s49 + $0x4c] sm:$0xf]
    %v1834 = vld [vmem:[%s49 + $0x50] sm:$0xf]
    %v1835 = vld [vmem:[%s49 + $0x54] sm:$0xf]
    %v1836 = vld [vmem:[%s49 + $0x58] sm:$0xf]
    %v1837 = vld [vmem:[%s49 + $0x5c] sm:$0xf]
    %v1838 = vld [vmem:[%s49 + $0x60] sm:$0xf]
    %v1839 = vld [vmem:[%s49 + $0x64] sm:$0xf]
    %v1840 = vld [vmem:[%s49 + $0x68] sm:$0xf]
    %v1841 = vld [vmem:[%s49 + $0x6c] sm:$0xf]
    %v1842 = vld [vmem:[%s49 + $0x70] sm:$0xf]
    %v1843 = vld [vmem:[%s49 + $0x74] sm:$0xf]
    %v1844 = vld [vmem:[%s49 + $0x78] sm:$0xf]
    %v1845 = vld [vmem:[%s49 + $0x7c] sm:$0xf]
    %v1846 = vpack.c.bf16 %v1812, %v1812
    %v1847 = vpack.c.bf16 %v1813, %v1813
    %v1848 = vld [vmem:[%s51] sm:$0x1]
    %v1850 = vlaneseq
    %v1851 = vshrl.u32 %v1850, 7
    %v1852 = vsub.s32 0, %v1851
    %v1853 = vrot.slane %v1848, %v1852
    %v1887 = vunpack.c.l.b16 %v1814
    %v1888 = vunpack.c.l.b16 %v1815
    %v1889 = vunpack.c.l.b16 %v1816
    %v1890 = vunpack.c.l.b16 %v1817
    %v1891 = vunpack.c.l.b16 %v1818
    %v1892 = vunpack.c.l.b16 %v1819
    %v1893 = vunpack.c.l.b16 %v1820
    %v1894 = vunpack.c.l.b16 %v1821
    %v1895 = vunpack.c.l.b16 %v1822
    %v1896 = vunpack.c.l.b16 %v1823
    %v1897 = vunpack.c.l.b16 %v1824
    %v1898 = vunpack.c.l.b16 %v1825
    %v1899 = vunpack.c.l.b16 %v1826
    %v1900 = vunpack.c.l.b16 %v1827
    %v1901 = vunpack.c.l.b16 %v1828
    %v1902 = vunpack.c.l.b16 %v1829
    %v1903 = vunpack.c.l.b16 %v1830
    %v1904 = vunpack.c.l.b16 %v1831
    %v1905 = vunpack.c.l.b16 %v1832
    %v1906 = vunpack.c.l.b16 %v1833
    %v1907 = vunpack.c.l.b16 %v1834
    %v1908 = vunpack.c.l.b16 %v1835
    %v1909 = vunpack.c.l.b16 %v1836
    %v1910 = vunpack.c.l.b16 %v1837
    %v1911 = vunpack.c.l.b16 %v1838
    %v1912 = vunpack.c.l.b16 %v1839
    %v1913 = vunpack.c.l.b16 %v1840
    %v1914 = vunpack.c.l.b16 %v1841
    %v1915 = vunpack.c.l.b16 %v1842
    %v1916 = vunpack.c.l.b16 %v1843
    %v1917 = vunpack.c.l.b16 %v1844
    %v1918 = vunpack.c.l.b16 %v1845
    %v1919 = vpack.c.b16 %v1888, %v1887
    %v1920 = vpack.c.b16 %v1890, %v1889
    %v1921 = vpack.c.b16 %v1892, %v1891
    %v1922 = vpack.c.b16 %v1894, %v1893
    %v1923 = vpack.c.b16 %v1896, %v1895
    %v1924 = vpack.c.b16 %v1898, %v1897
    %v1925 = vpack.c.b16 %v1900, %v1899
    %v1926 = vpack.c.b16 %v1902, %v1901
    %v1927 = vpack.c.b16 %v1904, %v1903
    %v1928 = vpack.c.b16 %v1906, %v1905
    %v1929 = vpack.c.b16 %v1908, %v1907
    %v1930 = vpack.c.b16 %v1910, %v1909
    %v1931 = vpack.c.b16 %v1912, %v1911
    %v1932 = vpack.c.b16 %v1914, %v1913
    %v1933 = vpack.c.b16 %v1916, %v1915
    %v1934 = vpack.c.b16 %v1918, %v1917
    %1951 = vmatprep.subr.bf16.mxu0 0
    %1952 = vmatpush1.bf16.msra.mxu0 %v1926
    %1953 = vmatprep.subr.bf16.mxu0 0
    %1954 = vmatpush1.bf16.msra.mxu0 %v1925
    %1955 = vmatprep.subr.bf16.mxu0 0
    %1956 = vmatpush1.bf16.msra.mxu0 %v1924
    %1957 = vmatprep.subr.bf16.mxu0 0
    %1958 = vmatpush1.bf16.msra.mxu0 %v1923
    %1959 = vmatprep.subr.bf16.mxu0 0
    %1960 = vmatpush1.bf16.msra.mxu0 %v1922
    %1961 = vmatprep.subr.bf16.mxu0 0
    %1962 = vmatpush1.bf16.msra.mxu0 %v1921
    %1963 = vmatprep.subr.bf16.mxu0 0
    %1964 = vmatpush1.bf16.msra.mxu0 %v1920
    %1965 = vmatprep.subr.bf16.mxu0 0
    %1966 = vmatpush1.bf16.msra.mxu0 %v1919
    %1967 = vmatprep.subr.bf16.mxu0 0
    %1968 = vmatpush2.bf16.msra.mxu0 %v1934
    %1969 = vmatprep.subr.bf16.mxu0 0
    %1970 = vmatpush2.bf16.msra.mxu0 %v1933
    %1971 = vmatprep.subr.bf16.mxu0 0
    %1972 = vmatpush2.bf16.msra.mxu0 %v1932
    %1973 = vmatprep.subr.bf16.mxu0 0
    %1974 = vmatpush2.bf16.msra.mxu0 %v1931
    %1975 = vmatprep.subr.bf16.mxu0 0
    %1976 = vmatpush2.bf16.msra.mxu0 %v1930
    %1977 = vmatprep.subr.bf16.mxu0 0
    %1978 = vmatpush2.bf16.msra.mxu0 %v1929
    %1979 = vmatprep.subr.bf16.mxu0 0
    %1980 = vmatpush2.bf16.msra.mxu0 %v1928
    %1981 = vmatprep.subr.bf16.mxu0 0
    %1982 = vmatpush2.bf16.msra.mxu0 %v1927
    %1983 = vmatprep.mubr.bf16.mxu0 %v1847
    %1984 = vmatmul.mubr.bf16.gmra.mxu0 %v1846
    %v1985 = vpop.f32.mrf.mxu0
    %v1986 = vadd.f32 %v1853, %v1985
    %v1987 = vpop.f32.mrf.mxu0
    %v1988 = vpop.f32.mrf.mxu0
    %v1989 = vpop.f32.mrf.mxu0
    %1990 = vdwg.mxu0
    %v1991 = vmax.f32 %v1986, 0.0
    %v1992 = vld [vmem:[%s53] sm:$0xf]
    %v1993 = vld [vmem:[%s53 + $0x4] sm:$0xf]
    %v1994 = vld [vmem:[%s53 + $0x8] sm:$0xf]
    %v1995 = vld [vmem:[%s53 + $0xc] sm:$0xf]
    %v1996 = vld [vmem:[%s53 + $0x10] sm:$0xf]
    %v1997 = vld [vmem:[%s53 + $0x14] sm:$0xf]
    %v1998 = vld [vmem:[%s53 + $0x18] sm:$0xf]
    %v1999 = vld [vmem:[%s53 + $0x1c] sm:$0xf]
    %v2000 = vld [vmem:[%s53 + $0x20] sm:$0xf]
    %v2001 = vld [vmem:[%s53 + $0x24] sm:$0xf]
    %v2002 = vld [vmem:[%s53 + $0x28] sm:$0xf]
    %v2003 = vld [vmem:[%s53 + $0x2c] sm:$0xf]
    %v2004 = vld [vmem:[%s53 + $0x30] sm:$0xf]
    %v2005 = vld [vmem:[%s53 + $0x34] sm:$0xf]
    %v2006 = vld [vmem:[%s53 + $0x38] sm:$0xf]
    %v2007 = vld [vmem:[%s53 + $0x3c] sm:$0xf]
    %v2008 = vpack.c.bf16 %v1991, %v1991
    %v2009 = vld [vmem:[%s55] sm:$0x1]
    %v2011 = vlaneseq
    %v2012 = vshrl.u32 %v2011, 7
    %v2013 = vsub.s32 0, %v2012
    %v2014 = vrot.slane %v2009, %v2013
    %v2032 = vunpack.c.l.b16 %v1992
    %v2033 = vunpack.c.l.b16 %v1993
    %v2034 = vunpack.c.l.b16 %v1994
    %v2035 = vunpack.c.l.b16 %v1995
    %v2036 = vunpack.c.l.b16 %v1996
    %v2037 = vunpack.c.l.b16 %v1997
    %v2038 = vunpack.c.l.b16 %v1998
    %v2039 = vunpack.c.l.b16 %v1999
    %v2040 = vunpack.c.l.b16 %v2000
    %v2041 = vunpack.c.l.b16 %v2001
    %v2042 = vunpack.c.l.b16 %v2002
    %v2043 = vunpack.c.l.b16 %v2003
    %v2044 = vunpack.c.l.b16 %v2004
    %v2045 = vunpack.c.l.b16 %v2005
    %v2046 = vunpack.c.l.b16 %v2006
    %v2047 = vunpack.c.l.b16 %v2007
    %v2048 = vpack.c.b16 %v2033, %v2032
    %v2049 = vpack.c.b16 %v2035, %v2034
    %v2050 = vpack.c.b16 %v2037, %v2036
    %v2051 = vpack.c.b16 %v2039, %v2038
    %v2052 = vpack.c.b16 %v2041, %v2040
    %v2053 = vpack.c.b16 %v2043, %v2042
    %v2054 = vpack.c.b16 %v2045, %v2044
    %v2055 = vpack.c.b16 %v2047, %v2046
    %2064 = vmatprep.subr.bf16.mxu0 0
    %2065 = vmatpush1.bf16.msra.mxu0 %v2055
    %2066 = vmatprep.subr.bf16.mxu0 0
    %2067 = vmatpush1.bf16.msra.mxu0 %v2054
    %2068 = vmatprep.subr.bf16.mxu0 0
    %2069 = vmatpush1.bf16.msra.mxu0 %v2053
    %2070 = vmatprep.subr.bf16.mxu0 0
    %2071 = vmatpush1.bf16.msra.mxu0 %v2052
    %2072 = vmatprep.subr.bf16.mxu0 0
    %2073 = vmatpush1.bf16.msra.mxu0 %v2051
    %2074 = vmatprep.subr.bf16.mxu0 0
    %2075 = vmatpush1.bf16.msra.mxu0 %v2050
    %2076 = vmatprep.subr.bf16.mxu0 0
    %2077 = vmatpush1.bf16.msra.mxu0 %v2049
    %2078 = vmatprep.subr.bf16.mxu0 0
    %2079 = vmatpush1.bf16.msra.mxu0 %v2048
    %2080 = vmatprep.subr.bf16.mxu0 0
    %2081 = vmatpush2.bf16.msra.mxu0 0
    %2082 = vmatprep.subr.bf16.mxu0 0
    %2083 = vmatpush2.bf16.msra.mxu0 0
    %2084 = vmatprep.subr.bf16.mxu0 0
    %2085 = vmatpush2.bf16.msra.mxu0 0
    %2086 = vmatprep.subr.bf16.mxu0 0
    %2087 = vmatpush2.bf16.msra.mxu0 0
    %2088 = vmatprep.subr.bf16.mxu0 0
    %2089 = vmatpush2.bf16.msra.mxu0 0
    %2090 = vmatprep.subr.bf16.mxu0 0
    %2091 = vmatpush2.bf16.msra.mxu0 0
    %2092 = vmatprep.subr.bf16.mxu0 0
    %2093 = vmatpush2.bf16.msra.mxu0 0
    %2094 = vmatprep.subr.bf16.mxu0 0
    %2095 = vmatpush2.bf16.msra.mxu0 0
    %2096 = vmatprep.mubr.bf16.mxu0 0
    %2097 = vmatmul.mubr.bf16.gmra.mxu0 %v2008
    %v2098 = vpop.f32.mrf.mxu0
    %v2099 = vadd.f32 %v2014, %v2098
    %v2100 = vpop.f32.mrf.mxu0
    %v2101 = vpop.f32.mrf.mxu0
    %v2102 = vpop.f32.mrf.mxu0
    %2103 = vdwg.mxu0
    %v2104 = vmul.f32 %v2099, 1.442695
    %v2105 = vpow.pop %v2104
    %v2106 = vld [vmem:[#allocation16] sm:$0x1]
    %v2108 = vlaneseq
    %v2109 = vshrl.u32 %v2108, 7
    %v2110 = vsub.s32 0, %v2109
    %v2111 = vrot.slane %v2106, %v2110
    %2112 = vrot.lane.b32.xlu0 %v2111, 32
    %v2113 = vpop.permute.xlu0 %2112
    %v2115 = vmul.f32 %v2105, %v2113
    %2117 = vrot.lane.b32.xlu0 %v2115, 96
    %v2118 = vpop.permute.xlu0 %2117
    %v2120 = vadd.f32 %v2099, %v2118
    %2122 = vrot.lane.b32.xlu0 %v2099, 32
    %v2123 = vpop.permute.xlu0 %2122
    %2126 = vrot.lane.b32.xlu0 %v2105, 64
    %v2127 = vpop.permute.xlu0 %2126
    %v2129 = vsel %vm517, %v2120, %v2123
    %v2130 = vsel %vm378, %v2129, %v2123
    %vm2131 = vcmask 785408
    %v2132 = vsel %vm2131, %v2130, %v2127
    %2133 = vst [vmem:[%s59] sm:$0x3] %v2132
    // Predicated region
    $region158: #{forward.1} parent=1 // pred_check
      _
    $region159: #{forward.1} parent=1 // pred_check_branch
      %2135 = sbr.rel (0) target = $region161
    $region160: #{forward.1} parent=1 // pred_region
      _
    $region161: #{forward.1} parent=1 // pred_fallthru
      _
    // Predicated region
    $region162: #{forward.1} parent=1 // pred_check
      _
    $region163: #{forward.1} parent=1 // pred_check_branch
      %2137 = sbr.rel (0) target = $region165
    $region164: #{forward.1} parent=1 // pred_region
      _
    $region165: #{forward.1} parent=1 // pred_fallthru
      _
    %2138 = vsyncpa [#allocation3], 1
    %2139 = vsyncpa [#allocation5], 1
    %2140 = vsyncpa [#allocation8], 1
    %2141 = vsyncpa [#allocation11], 1
    %2142 = vsyncpa [#allocation14], 1
    %2143 = vsyncpa [#allocation17], 1

</llo_original>
